<compile_context>
chip_gen: v5e
topology: v5e:2x2
jax: 0.10.0
libtpu: 0.0.40
codegen_flags: <defaults>
</compile_context>

<pallas_src>
import functools

import jax
import jax.numpy as jnp
from jax.experimental import pallas as pl
from jax.experimental.pallas import tpu as pltpu

EPS = 1e-5  # BatchNorm1d default eps


def _bn_relu_rows(h):
    """Training-mode BatchNorm (gamma=1, beta=0) + ReLU on a (C, M) slab.

    Stats are per channel (= per row), computed in one traversal (sum and
    sum-of-squares, both f32) so the two lane reductions overlap.  The
    normalize is expressed as one scale/shift (scale via rsqrt on the EUP).
    """
    inv_m = 1.0 / h.shape[1]
    s1 = jnp.sum(h, axis=1, keepdims=True)
    s2 = jnp.sum(h * h, axis=1, keepdims=True)
    mean = s1 * inv_m
    var = s2 * inv_m - mean * mean
    scale = jax.lax.rsqrt(var + EPS)          # (C, 1), EUP
    shift = -mean * scale                     # (C, 1), tiny column
    return jnp.maximum(h * scale + shift, 0.0)


def _mapping2d3d_kernel(num_layers, B, N,
                        pts_ref, lat_ref, w1_ref, w2_ref, wl_ref, wlast_ref,
                        blast_ref, out_ref):
    """One grid step == one primitive's Mapping2Dto3D MLP over all B*N points."""
    pts = pts_ref[0]          # (d_in, N)   shared template points (no batch tiling)
    lat = lat_ref[...]        # (bot, B)    latent, one column per batch element

    # conv1 once on the shared template (B-fold less MXU work and DMA than
    # tiling the template across batch).  conv1's bias is cancelled by bn1.
    h0 = jnp.dot(w1_ref[0], pts, preferred_element_type=jnp.float32)   # (bot, N)

    # Broadcast across the batch; the latent acts as a per-batch bias after
    # layer 1 (exactly the PyTorch broadcast conv1(x)[1,C,N] + latent[B,C,1]).
    h = jnp.concatenate([h0 + lat[:, b:b + 1] for b in range(B)], axis=1)  # (bot, B*N)
    h = _bn_relu_rows(h)                                                   # bn1 + relu

    # conv2 + bn2 + relu  (conv2 bias cancelled by bn2)
    h = _bn_relu_rows(jnp.dot(w2_ref[0], h, preferred_element_type=jnp.float32))

    # conv_list / bn_list / relu  (biases cancelled by the following BN)
    for l in range(num_layers):
        h = _bn_relu_rows(
            jnp.dot(wl_ref[0, l], h, preferred_element_type=jnp.float32))

    # last_conv (no BN, no activation) -> keep its bias.  (3, B*N)
    out2d = (jnp.dot(wlast_ref[0], h, preferred_element_type=jnp.float32)
             + blast_ref[0])                                    # (3, B*N) + (3, 1)

    # Emit the final layout directly: out[b, c, n] = out2d[c, b*N + n].
    # Each store is a full-128-lane (3, N) slab at a 128-aligned offset.
    for b in range(B):
        out_ref[b] = out2d[:, b * N:(b + 1) * N]


def atlasnet_forward(latent, points, params, *, num_layers):
    """latent: (B, bottleneck); points: (P, d_in, N) channels-first templates.

    params use the PyTorch Conv1d (out_channels, in_channels) layout per
    primitive.  Returns (B, 3, P*N), matching Atlasnet.forward.
    (b1 / b2 / bl are accepted but unused: they are exactly cancelled by the
    training-mode BatchNorms with default affine parameters.)
    """
    P, d_in, N = points.shape
    B, bot = latent.shape
    hid = params["w2"].shape[1]
    L = num_layers

    lat_T = latent.T                         # (bot, B)  -- tiny, VMEM-resident
    blast = params["blast"][:, :, None]      # (P, 3, 1) -- only surviving bias

    out = pl.pallas_call(
        functools.partial(_mapping2d3d_kernel, L, B, N),
        out_shape=jax.ShapeDtypeStruct((B, 3, P * N), jnp.float32),
        grid_spec=pltpu.PrefetchScalarGridSpec(
            num_scalar_prefetch=0,
            grid=(P,),
            in_specs=[
                pl.BlockSpec((1, d_in, N), lambda p: (p, 0, 0)),         # template pts
                pl.BlockSpec((bot, B), lambda p: (0, 0)),                # latent (resident)
                pl.BlockSpec((1, bot, d_in), lambda p: (p, 0, 0)),       # conv1 w
                pl.BlockSpec((1, hid, bot), lambda p: (p, 0, 0)),        # conv2 w
                pl.BlockSpec((1, L, hid, hid), lambda p: (p, 0, 0, 0)),  # conv_list w
                pl.BlockSpec((1, 3, hid), lambda p: (p, 0, 0)),          # last_conv w
                pl.BlockSpec((1, 3, 1), lambda p: (p, 0, 0)),            # last_conv b
            ],
            out_specs=pl.BlockSpec((B, 3, N), lambda p: (0, 0, p)),
        ),
        # "parallel" on the primitive axis: a no-op on single-TC v5e/v6e, and
        # lets the grid be sharded across both TensorCores on v7x.
        compiler_params=pltpu.CompilerParams(
            dimension_semantics=("parallel",)),
    )(points, lat_T, params["w1"], params["w2"], params["wl"],
      params["wlast"], blast)
    return out


def _bn_relu_ref(x):
    """PyTorch BatchNorm1d training-mode stats on channels-first (B, C, N)."""
    mu = jnp.mean(x, axis=(0, 2), keepdims=True)
    var = jnp.mean((x - mu) ** 2, axis=(0, 2), keepdims=True)
    return jnp.maximum((x - mu) * jax.lax.rsqrt(var + EPS), 0.0)


def atlasnet_reference(latent, points, params, *, num_layers):
    """Pure-JAX reference mirroring Atlasnet.forward (all biases included)."""
    P, d_in, N = points.shape
    B = latent.shape[0]
    outs = []
    for p in range(P):
        x = (jnp.einsum("oi,in->on", params["w1"][p], points[p])
             + params["b1"][p][:, None])
        x = x[None, :, :] + latent[:, :, None]                   # (B, bot, N)
        x = _bn_relu_ref(x)
        x = _bn_relu_ref(jnp.einsum("oi,bin->bon", params["w2"][p], x)
                         + params["b2"][p][None, :, None])
        for l in range(num_layers):
            x = _bn_relu_ref(jnp.einsum("oi,bin->bon", params["wl"][p, l], x)
                             + params["bl"][p, l][None, :, None])
        x = (jnp.einsum("oi,bin->bon", params["wlast"][p], x)
             + params["blast"][p][None, :, None])                # (B, 3, N)
        outs.append(x)
    out = jnp.stack(outs, axis=1)                                # (B, P, 3, N)
    out = jnp.transpose(out, (0, 1, 3, 2)).reshape(B, P * N, 3)  # (B, P*N, 3)
    return jnp.transpose(out, (0, 2, 1))                         # (B, 3, P*N)


if __name__ == "__main__":
    # Small "opt" consistent with the module:
    #   template_type=SPHERE -> dim_template=3, activation='relu'
    B = 2                  # batch
    bottleneck = 32        # opt.bottleneck_size
    hidden = 32            # opt.hidden_neurons
    num_layers = 2         # opt.num_layers
    nb_primitives = 2      # opt.nb_primitives
    number_points = 256    # opt.number_points
    N = number_points // nb_primitives
    d_in = 3               # SphereTemplate.dim

    key = jax.random.PRNGKey(0)
    keys = jax.random.split(key, 10)

    # Latent vector: (B, bottleneck)
    latent = jax.random.normal(keys[0], (B, bottleneck), dtype=jnp.float32)

    # Sphere template random points, channels-first (P, 3, N): normal(0,1),
    # normalized over the channel axis (unit sphere), shared across the batch
    # (PyTorch uses shape (1, 3, N)).
    raw = jax.random.normal(keys[1], (nb_primitives, d_in, N), dtype=jnp.float32)
    points = raw / jnp.sqrt(jnp.sum(raw ** 2, axis=1, keepdims=True))

    # Deterministic per-primitive decoder params in PyTorch Conv1d (out, in) layout.
    s = 0.1
    params = {
        "w1":    s * jax.random.normal(keys[2], (nb_primitives, bottleneck, d_in), jnp.float32),
        "b1":    s * jax.random.normal(keys[3], (nb_primitives, bottleneck), jnp.float32),
        "w2":    s * jax.random.normal(keys[4], (nb_primitives, hidden, bottleneck), jnp.float32),
        "b2":    s * jax.random.normal(keys[5], (nb_primitives, hidden), jnp.float32),
        "wl":    s * jax.random.normal(keys[6], (nb_primitives, num_layers, hidden, hidden), jnp.float32),
        "bl":    s * jax.random.normal(keys[7], (nb_primitives, num_layers, hidden), jnp.float32),
        "wlast": s * jax.random.normal(keys[8], (nb_primitives, 3, hidden), jnp.float32),
        "blast": s * jax.random.normal(keys[9], (nb_primitives, 3), jnp.float32),
    }

    out = jax.block_until_ready(
        atlasnet_forward(latent, points, params, num_layers=num_layers))
    ref = jax.block_until_ready(
        atlasnet_reference(latent, points, params, num_layers=num_layers))

    assert out.shape == (B, 3, nb_primitives * N), out.shape
    assert jnp.allclose(out, ref, rtol=2e-3, atol=2e-3), (
        float(jnp.max(jnp.abs(out - ref))))

    print("KERNEL_OK")
</pallas_src>

<mosaic_0001>
module attributes {stable_mosaic.version = 11 : i64} {
  func.func @_mapping2d3d_kernel(%arg0: i32, %arg1: memref<1x3x128xf32, #tpu.memory_space<vmem>>, %arg2: memref<32x2xf32, #tpu.memory_space<vmem>>, %arg3: memref<1x32x3xf32, #tpu.memory_space<vmem>>, %arg4: memref<1x32x32xf32, #tpu.memory_space<vmem>>, %arg5: memref<1x2x32x32xf32, #tpu.memory_space<vmem>>, %arg6: memref<1x3x32xf32, #tpu.memory_space<vmem>>, %arg7: memref<1x3x1xf32, #tpu.memory_space<vmem>>, %arg8: memref<2x3x128xf32, #tpu.memory_space<vmem>>) attributes {dimension_semantics = [#tpu.dimension_semantics<parallel>], iteration_bounds = array<i64: 2>, scalar_prefetch = 0 : i64, scratch_operands = 0 : i64, tpu.core_type = #tpu.core_type<tc>, window_params = [{transform_indices = @transform_0, window_bounds = array<i64: 1, 3, 128>}, {pipeline_mode = #tpu.pipeline_mode<synchronous>, transform_indices = @transform_1, window_bounds = array<i64: 32, 2>}, {transform_indices = @transform_2, window_bounds = array<i64: 1, 32, 3>}, {transform_indices = @transform_3, window_bounds = array<i64: 1, 32, 32>}, {transform_indices = @transform_4, window_bounds = array<i64: 1, 2, 32, 32>}, {transform_indices = @transform_5, window_bounds = array<i64: 1, 3, 32>}, {transform_indices = @transform_6, window_bounds = array<i64: 1, 3, 1>}, {transform_indices = @transform_7, window_bounds = array<i64: 2, 3, 128>}]} {
    %c0 = arith.constant 0 : index
    %c0_0 = arith.constant 0 : index
    %c0_1 = arith.constant 0 : index
    %0 = vector.load %arg1[%c0, %c0_0, %c0_1] : memref<1x3x128xf32, #tpu.memory_space<vmem>>, vector<1x3x128xf32>
    %1 = vector.shape_cast %0 : vector<1x3x128xf32> to vector<3x128xf32>
    %c0_2 = arith.constant 0 : index
    %c0_3 = arith.constant 0 : index
    %2 = vector.load %arg2[%c0_2, %c0_3] : memref<32x2xf32, #tpu.memory_space<vmem>>, vector<32x2xf32>
    %c0_4 = arith.constant 0 : index
    %c0_5 = arith.constant 0 : index
    %c0_6 = arith.constant 0 : index
    %3 = vector.load %arg3[%c0_4, %c0_5, %c0_6] : memref<1x32x3xf32, #tpu.memory_space<vmem>>, vector<1x32x3xf32>
    %4 = vector.shape_cast %3 : vector<1x32x3xf32> to vector<32x3xf32>
    %cst = arith.constant dense<0.000000e+00> : vector<32x128xf32>
    %5 = tpu.matmul %4, %1, %cst {dimension_numbers = #tpu.dot_dimension_numbers<[1], [0], [0], [1], [0, 0, 1, 1], [], []>} : vector<32x3xf32>, vector<3x128xf32>, vector<32x128xf32> -> vector<32x128xf32>
    %6 = vector.extract_strided_slice %2 {offsets = [0, 0], sizes = [32, 1], strides = [1, 1]} : vector<32x2xf32> to vector<32x1xf32>
    %7 = vector.broadcast %6 : vector<32x1xf32> to vector<32x128xf32>
    %8 = arith.addf %5, %7 : vector<32x128xf32>
    %9 = vector.extract_strided_slice %2 {offsets = [0, 1], sizes = [32, 1], strides = [1, 1]} : vector<32x2xf32> to vector<32x1xf32>
    %10 = vector.broadcast %9 : vector<32x1xf32> to vector<32x128xf32>
    %11 = arith.addf %5, %10 : vector<32x128xf32>
    %12 = tpu.concatenate %8, %11 in 1 : vector<32x128xf32>, vector<32x128xf32> -> vector<32x256xf32>
    %cst_7 = arith.constant dense<0.000000e+00> : vector<32xf32>
    %13 = vector.multi_reduction <add>, %12, %cst_7 [1] : vector<32x256xf32> to vector<32xf32>
    %14 = vector.shape_cast %13 : vector<32xf32> to vector<32x1xf32>
    %15 = arith.mulf %12, %12 : vector<32x256xf32>
    %cst_8 = arith.constant dense<0.000000e+00> : vector<32xf32>
    %16 = vector.multi_reduction <add>, %15, %cst_8 [1] : vector<32x256xf32> to vector<32xf32>
    %17 = vector.shape_cast %16 : vector<32xf32> to vector<32x1xf32>
    %cst_9 = arith.constant 3.906250e-03 : f32
    %18 = vector.broadcast %cst_9 : f32 to vector<32x1xf32>
    %19 = arith.mulf %14, %18 : vector<32x1xf32>
    %cst_10 = arith.constant 3.906250e-03 : f32
    %20 = vector.broadcast %cst_10 : f32 to vector<32x1xf32>
    %21 = arith.mulf %17, %20 : vector<32x1xf32>
    %22 = arith.mulf %19, %19 : vector<32x1xf32>
    %23 = arith.subf %21, %22 : vector<32x1xf32>
    %cst_11 = arith.constant 9.99999974E-6 : f32
    %24 = vector.broadcast %cst_11 : f32 to vector<32x1xf32>
    %25 = arith.addf %23, %24 : vector<32x1xf32>
    %26 = math.rsqrt %25 : vector<32x1xf32>
    %cst_12 = arith.constant 0.000000e+00 : f32
    %27 = vector.broadcast %cst_12 : f32 to vector<32x1xf32>
    %28 = arith.subf %27, %19 : vector<32x1xf32>
    %29 = arith.mulf %28, %26 : vector<32x1xf32>
    %30 = vector.broadcast %26 : vector<32x1xf32> to vector<32x256xf32>
    %31 = arith.mulf %12, %30 : vector<32x256xf32>
    %32 = vector.broadcast %29 : vector<32x1xf32> to vector<32x256xf32>
    %33 = arith.addf %31, %32 : vector<32x256xf32>
    %cst_13 = arith.constant 0.000000e+00 : f32
    %34 = vector.broadcast %cst_13 : f32 to vector<32x256xf32>
    %35 = arith.maximumf %33, %34 : vector<32x256xf32>
    %c0_14 = arith.constant 0 : index
    %c0_15 = arith.constant 0 : index
    %c0_16 = arith.constant 0 : index
    %36 = vector.load %arg4[%c0_14, %c0_15, %c0_16] : memref<1x32x32xf32, #tpu.memory_space<vmem>>, vector<1x32x32xf32>
    %37 = vector.shape_cast %36 : vector<1x32x32xf32> to vector<32x32xf32>
    %cst_17 = arith.constant dense<0.000000e+00> : vector<32x256xf32>
    %38 = tpu.matmul %37, %35, %cst_17 {dimension_numbers = #tpu.dot_dimension_numbers<[1], [0], [0], [1], [0, 0, 1, 1], [], []>} : vector<32x32xf32>, vector<32x256xf32>, vector<32x256xf32> -> vector<32x256xf32>
    %cst_18 = arith.constant dense<0.000000e+00> : vector<32xf32>
    %39 = vector.multi_reduction <add>, %38, %cst_18 [1] : vector<32x256xf32> to vector<32xf32>
    %40 = vector.shape_cast %39 : vector<32xf32> to vector<32x1xf32>
    %41 = arith.mulf %38, %38 : vector<32x256xf32>
    %cst_19 = arith.constant dense<0.000000e+00> : vector<32xf32>
    %42 = vector.multi_reduction <add>, %41, %cst_19 [1] : vector<32x256xf32> to vector<32xf32>
    %43 = vector.shape_cast %42 : vector<32xf32> to vector<32x1xf32>
    %cst_20 = arith.constant 3.906250e-03 : f32
    %44 = vector.broadcast %cst_20 : f32 to vector<32x1xf32>
    %45 = arith.mulf %40, %44 : vector<32x1xf32>
    %cst_21 = arith.constant 3.906250e-03 : f32
    %46 = vector.broadcast %cst_21 : f32 to vector<32x1xf32>
    %47 = arith.mulf %43, %46 : vector<32x1xf32>
    %48 = arith.mulf %45, %45 : vector<32x1xf32>
    %49 = arith.subf %47, %48 : vector<32x1xf32>
    %cst_22 = arith.constant 9.99999974E-6 : f32
    %50 = vector.broadcast %cst_22 : f32 to vector<32x1xf32>
    %51 = arith.addf %49, %50 : vector<32x1xf32>
    %52 = math.rsqrt %51 : vector<32x1xf32>
    %cst_23 = arith.constant 0.000000e+00 : f32
    %53 = vector.broadcast %cst_23 : f32 to vector<32x1xf32>
    %54 = arith.subf %53, %45 : vector<32x1xf32>
    %55 = arith.mulf %54, %52 : vector<32x1xf32>
    %56 = vector.broadcast %52 : vector<32x1xf32> to vector<32x256xf32>
    %57 = arith.mulf %38, %56 : vector<32x256xf32>
    %58 = vector.broadcast %55 : vector<32x1xf32> to vector<32x256xf32>
    %59 = arith.addf %57, %58 : vector<32x256xf32>
    %cst_24 = arith.constant 0.000000e+00 : f32
    %60 = vector.broadcast %cst_24 : f32 to vector<32x256xf32>
    %61 = arith.maximumf %59, %60 : vector<32x256xf32>
    %c0_25 = arith.constant 0 : index
    %c0_26 = arith.constant 0 : index
    %c0_27 = arith.constant 0 : index
    %c0_28 = arith.constant 0 : index
    %62 = vector.load %arg5[%c0_25, %c0_26, %c0_27, %c0_28] : memref<1x2x32x32xf32, #tpu.memory_space<vmem>>, vector<1x1x32x32xf32>
    %63 = vector.shape_cast %62 : vector<1x1x32x32xf32> to vector<32x32xf32>
    %cst_29 = arith.constant dense<0.000000e+00> : vector<32x256xf32>
    %64 = tpu.matmul %63, %61, %cst_29 {dimension_numbers = #tpu.dot_dimension_numbers<[1], [0], [0], [1], [0, 0, 1, 1], [], []>} : vector<32x32xf32>, vector<32x256xf32>, vector<32x256xf32> -> vector<32x256xf32>
    %cst_30 = arith.constant dense<0.000000e+00> : vector<32xf32>
    %65 = vector.multi_reduction <add>, %64, %cst_30 [1] : vector<32x256xf32> to vector<32xf32>
    %66 = vector.shape_cast %65 : vector<32xf32> to vector<32x1xf32>
    %67 = arith.mulf %64, %64 : vector<32x256xf32>
    %cst_31 = arith.constant dense<0.000000e+00> : vector<32xf32>
    %68 = vector.multi_reduction <add>, %67, %cst_31 [1] : vector<32x256xf32> to vector<32xf32>
    %69 = vector.shape_cast %68 : vector<32xf32> to vector<32x1xf32>
    %cst_32 = arith.constant 3.906250e-03 : f32
    %70 = vector.broadcast %cst_32 : f32 to vector<32x1xf32>
    %71 = arith.mulf %66, %70 : vector<32x1xf32>
    %cst_33 = arith.constant 3.906250e-03 : f32
    %72 = vector.broadcast %cst_33 : f32 to vector<32x1xf32>
    %73 = arith.mulf %69, %72 : vector<32x1xf32>
    %74 = arith.mulf %71, %71 : vector<32x1xf32>
    %75 = arith.subf %73, %74 : vector<32x1xf32>
    %cst_34 = arith.constant 9.99999974E-6 : f32
    %76 = vector.broadcast %cst_34 : f32 to vector<32x1xf32>
    %77 = arith.addf %75, %76 : vector<32x1xf32>
    %78 = math.rsqrt %77 : vector<32x1xf32>
    %cst_35 = arith.constant 0.000000e+00 : f32
    %79 = vector.broadcast %cst_35 : f32 to vector<32x1xf32>
    %80 = arith.subf %79, %71 : vector<32x1xf32>
    %81 = arith.mulf %80, %78 : vector<32x1xf32>
    %82 = vector.broadcast %78 : vector<32x1xf32> to vector<32x256xf32>
    %83 = arith.mulf %64, %82 : vector<32x256xf32>
    %84 = vector.broadcast %81 : vector<32x1xf32> to vector<32x256xf32>
    %85 = arith.addf %83, %84 : vector<32x256xf32>
    %cst_36 = arith.constant 0.000000e+00 : f32
    %86 = vector.broadcast %cst_36 : f32 to vector<32x256xf32>
    %87 = arith.maximumf %85, %86 : vector<32x256xf32>
    %c0_37 = arith.constant 0 : index
    %c1 = arith.constant 1 : index
    %c0_38 = arith.constant 0 : index
    %c0_39 = arith.constant 0 : index
    %88 = vector.load %arg5[%c0_37, %c1, %c0_38, %c0_39] : memref<1x2x32x32xf32, #tpu.memory_space<vmem>>, vector<1x1x32x32xf32>
    %89 = vector.shape_cast %88 : vector<1x1x32x32xf32> to vector<32x32xf32>
    %cst_40 = arith.constant dense<0.000000e+00> : vector<32x256xf32>
    %90 = tpu.matmul %89, %87, %cst_40 {dimension_numbers = #tpu.dot_dimension_numbers<[1], [0], [0], [1], [0, 0, 1, 1], [], []>} : vector<32x32xf32>, vector<32x256xf32>, vector<32x256xf32> -> vector<32x256xf32>
    %cst_41 = arith.constant dense<0.000000e+00> : vector<32xf32>
    %91 = vector.multi_reduction <add>, %90, %cst_41 [1] : vector<32x256xf32> to vector<32xf32>
    %92 = vector.shape_cast %91 : vector<32xf32> to vector<32x1xf32>
    %93 = arith.mulf %90, %90 : vector<32x256xf32>
    %cst_42 = arith.constant dense<0.000000e+00> : vector<32xf32>
    %94 = vector.multi_reduction <add>, %93, %cst_42 [1] : vector<32x256xf32> to vector<32xf32>
    %95 = vector.shape_cast %94 : vector<32xf32> to vector<32x1xf32>
    %cst_43 = arith.constant 3.906250e-03 : f32
    %96 = vector.broadcast %cst_43 : f32 to vector<32x1xf32>
    %97 = arith.mulf %92, %96 : vector<32x1xf32>
    %cst_44 = arith.constant 3.906250e-03 : f32
    %98 = vector.broadcast %cst_44 : f32 to vector<32x1xf32>
    %99 = arith.mulf %95, %98 : vector<32x1xf32>
    %100 = arith.mulf %97, %97 : vector<32x1xf32>
    %101 = arith.subf %99, %100 : vector<32x1xf32>
    %cst_45 = arith.constant 9.99999974E-6 : f32
    %102 = vector.broadcast %cst_45 : f32 to vector<32x1xf32>
    %103 = arith.addf %101, %102 : vector<32x1xf32>
    %104 = math.rsqrt %103 : vector<32x1xf32>
    %cst_46 = arith.constant 0.000000e+00 : f32
    %105 = vector.broadcast %cst_46 : f32 to vector<32x1xf32>
    %106 = arith.subf %105, %97 : vector<32x1xf32>
    %107 = arith.mulf %106, %104 : vector<32x1xf32>
    %108 = vector.broadcast %104 : vector<32x1xf32> to vector<32x256xf32>
    %109 = arith.mulf %90, %108 : vector<32x256xf32>
    %110 = vector.broadcast %107 : vector<32x1xf32> to vector<32x256xf32>
    %111 = arith.addf %109, %110 : vector<32x256xf32>
    %cst_47 = arith.constant 0.000000e+00 : f32
    %112 = vector.broadcast %cst_47 : f32 to vector<32x256xf32>
    %113 = arith.maximumf %111, %112 : vector<32x256xf32>
    %c0_48 = arith.constant 0 : index
    %c0_49 = arith.constant 0 : index
    %c0_50 = arith.constant 0 : index
    %114 = vector.load %arg6[%c0_48, %c0_49, %c0_50] : memref<1x3x32xf32, #tpu.memory_space<vmem>>, vector<1x3x32xf32>
    %115 = vector.shape_cast %114 : vector<1x3x32xf32> to vector<3x32xf32>
    %cst_51 = arith.constant dense<0.000000e+00> : vector<3x256xf32>
    %116 = tpu.matmul %115, %113, %cst_51 {dimension_numbers = #tpu.dot_dimension_numbers<[1], [0], [0], [1], [0, 0, 1, 1], [], []>} : vector<3x32xf32>, vector<32x256xf32>, vector<3x256xf32> -> vector<3x256xf32>
    %c0_52 = arith.constant 0 : index
    %c0_53 = arith.constant 0 : index
    %c0_54 = arith.constant 0 : index
    %117 = vector.load %arg7[%c0_52, %c0_53, %c0_54] : memref<1x3x1xf32, #tpu.memory_space<vmem>>, vector<1x3x1xf32>
    %118 = vector.shape_cast %117 : vector<1x3x1xf32> to vector<3x1xf32>
    %119 = vector.broadcast %118 : vector<3x1xf32> to vector<3x256xf32>
    %120 = arith.addf %116, %119 : vector<3x256xf32>
    %121 = vector.extract_strided_slice %120 {offsets = [0, 0], sizes = [3, 128], strides = [1, 1]} : vector<3x256xf32> to vector<3x128xf32>
    %c0_55 = arith.constant 0 : index
    %c0_56 = arith.constant 0 : index
    %c0_57 = arith.constant 0 : index
    %122 = vector.load %arg8[%c0_55, %c0_56, %c0_57] : memref<2x3x128xf32, #tpu.memory_space<vmem>>, vector<1x3x128xf32>
    %123 = vector.shape_cast %122 : vector<1x3x128xf32> to vector<3x128xf32>
    %124 = vector.shape_cast %121 : vector<3x128xf32> to vector<1x3x128xf32>
    tpu.vector_store %arg8[%c0_55, %c0_56, %c0_57], %124 {strides = array<i32>} : memref<2x3x128xf32, #tpu.memory_space<vmem>>, vector<1x3x128xf32>,
    %125 = vector.extract_strided_slice %120 {offsets = [0, 128], sizes = [3, 128], strides = [1, 1]} : vector<3x256xf32> to vector<3x128xf32>
    %c1_58 = arith.constant 1 : index
    %c0_59 = arith.constant 0 : index
    %c0_60 = arith.constant 0 : index
    %126 = vector.load %arg8[%c1_58, %c0_59, %c0_60] : memref<2x3x128xf32, #tpu.memory_space<vmem>>, vector<1x3x128xf32>
    %127 = vector.shape_cast %126 : vector<1x3x128xf32> to vector<3x128xf32>
    %128 = vector.shape_cast %125 : vector<3x128xf32> to vector<1x3x128xf32>
    tpu.vector_store %arg8[%c1_58, %c0_59, %c0_60], %128 {strides = array<i32>} : memref<2x3x128xf32, #tpu.memory_space<vmem>>, vector<1x3x128xf32>,
    return
  }
  func.func @transform_0(%arg0: i32) -> (i32, i32, i32) {
    %c0_i32 = arith.constant 0 : i32
    %c0_i32_0 = arith.constant 0 : i32
    %c0_i32_1 = arith.constant 0 : i32
    return %arg0, %c0_i32, %c0_i32_0 : i32, i32, i32
  }
  func.func @transform_1(%arg0: i32) -> (i32, i32) {
    %c0_i32 = arith.constant 0 : i32
    %c0_i32_0 = arith.constant 0 : i32
    %c0_i32_1 = arith.constant 0 : i32
    return %c0_i32, %c0_i32_0 : i32, i32
  }
  func.func @transform_2(%arg0: i32) -> (i32, i32, i32) {
    %c0_i32 = arith.constant 0 : i32
    %c0_i32_0 = arith.constant 0 : i32
    %c0_i32_1 = arith.constant 0 : i32
    return %arg0, %c0_i32, %c0_i32_0 : i32, i32, i32
  }
  func.func @transform_3(%arg0: i32) -> (i32, i32, i32) {
    %c0_i32 = arith.constant 0 : i32
    %c0_i32_0 = arith.constant 0 : i32
    %c0_i32_1 = arith.constant 0 : i32
    return %arg0, %c0_i32, %c0_i32_0 : i32, i32, i32
  }
  func.func @transform_4(%arg0: i32) -> (i32, i32, i32, i32) {
    %c0_i32 = arith.constant 0 : i32
    %c0_i32_0 = arith.constant 0 : i32
    %c0_i32_1 = arith.constant 0 : i32
    %c0_i32_2 = arith.constant 0 : i32
    return %arg0, %c0_i32, %c0_i32_0, %c0_i32_1 : i32, i32, i32, i32
  }
  func.func @transform_5(%arg0: i32) -> (i32, i32, i32) {
    %c0_i32 = arith.constant 0 : i32
    %c0_i32_0 = arith.constant 0 : i32
    %c0_i32_1 = arith.constant 0 : i32
    return %arg0, %c0_i32, %c0_i32_0 : i32, i32, i32
  }
  func.func @transform_6(%arg0: i32) -> (i32, i32, i32) {
    %c0_i32 = arith.constant 0 : i32
    %c0_i32_0 = arith.constant 0 : i32
    %c0_i32_1 = arith.constant 0 : i32
    return %arg0, %c0_i32, %c0_i32_0 : i32, i32, i32
  }
  func.func @transform_7(%arg0: i32) -> (i32, i32, i32) {
    %c0_i32 = arith.constant 0 : i32
    %c0_i32_0 = arith.constant 0 : i32
    %c0_i32_1 = arith.constant 0 : i32
    return %c0_i32, %c0_i32_0, %arg0 : i32, i32, i32
  }
}

</mosaic_0001>

<llo_original>
// kernel: tpu_custom_call.1
$region0: #{tpu_custom_call.1}
  #allocation0 [shape = 'u32[]', space=smem, size = 0x4, offset = 0x4, fixed_abs, tag = 'smem constant byte address 0x4 - core index']
  #allocation1 [shape = 'u32[72,128]{1,0:T(1,128)}', space=vmem, size = 0x9000, scoped, tag = 'internal scratch']
  %s0 = inlined_call_operand.vmem [shape: f32[2,3,128], index: 0, kind: input, shape index: {}]
  %s1 = inlined_call_operand.vmem [shape: f32[32,2], index: 1, kind: input, shape index: {}]
  %s2 = inlined_call_operand.vmem [shape: f32[2,32,3], index: 2, kind: input, shape index: {}]
  %s3 = inlined_call_operand.vmem [shape: f32[2,32,32], index: 3, kind: input, shape index: {}]
  %s4 = inlined_call_operand.hbm [shape: f32[2,2,32,32], index: 4, kind: input, shape index: {}]
  %s5 = inlined_call_operand.vmem [shape: f32[2,3,32], index: 5, kind: input, shape index: {}]
  %s6 = inlined_call_operand.vmem [shape: f32[2,3,1], index: 6, kind: input, shape index: {}]
  %s7 = inlined_call_operand.vmem [shape: f32[2,3,256], index: 7, kind: output, shape index: {}]
  %s8 = sld [smem:[#allocation0]]
  $region102: #{tpu_custom_call.1} parent=0
    _
  %s10 = ssub.s32 1, %s8
  %s11 = scalar_select 0, %s10, %s8
  $region1: #{tpu_custom_call.1} parent=0
    #allocation2 [shape = 'u8[65536]{0}', space=vmem, size = 0x10000, scoped, tag = 'input window, operand 4']
    #allocation3 [shape = 's32[2]{0}', space=sflag, size = 0x8, scoped, tag = 'scoped memory for tpu_custom_call.1']
    #allocation4 [shape = 'u8[8192]{0}', space=vmem, size = 0x2000, scoped, tag = 'output window, operand 0']
    %12 = vsyncpa [#allocation3], 0
    %s13 = scalar_lea.sflag [#allocation3], 1
    %14 = vsyncpa %s13, 0
    loop: start=0, step=1, limit=4
    $region2: #{tpu_custom_call.1} parent=1 // loop_pre_header
      _
    $region3: #{tpu_custom_call.1} parent=1 // loop_header
      %s16 = sphi 0, %s20
      %p17 = scmp.ge.s32.totalorder %s16, 4
      %s26 = sphi 0, %s28
      %s29 = sphi 0, %s26
      %s30 = sphi 0, %s29
      %s46 = sphi 0, %s30
      %s50 = sphi 0, %s50
      %s52 = sphi 0, %s50
      %s53 = sphi 0, %s52
      %s67 = sphi 0, %s53
      %s73 = sphi 0, %s75
      %s76 = sphi 0, %s73
      %s77 = sphi 0, %s76
      %s93 = sphi 0, %s77
      %s99 = sphi 0, %s101
      %s102 = sphi 0, %s99
      %s103 = sphi 0, %s102
      %s119 = sphi 0, %s103
      %s125 = sphi 0, %s127
      %s128 = sphi 0, %s125
      %s129 = sphi 0, %s128
      %s145 = sphi 0, %s129
      %s151 = sphi 0, %s153
      %s154 = sphi 0, %s151
      %s155 = sphi 0, %s154
      %s171 = sphi 0, %s155
      %s177 = sphi 0, %s179
      %s180 = sphi 0, %s177
      %s181 = sphi 0, %s180
      %s197 = sphi 0, %s181
      %s203 = sphi 0, %s205
      %s206 = sphi 0, %s203
      %s207 = sphi 0, %s206
      %s223 = sphi 0, %s207
    $region4: #{tpu_custom_call.1} parent=1 // loop_header_branch
      %19 = sbr.rel (%p17) target = $region8
    $region5: #{tpu_custom_call.1} parent=1 // loop_body
      %s21 = ssub.s32 %s16, 1
      %s22 = ssub.s32 %s16, 2
      %s23 = sadd.s32 %s16, 1
      %s24 = ssub.s32 %s16, %s23
      %p25 = scmp.eq.s32.totalorder %s24, 0
      %s27 = sadd.s32 %s26, 1
      %s28 = scalar_select %p25, %s26, %s27
      %p31 = pneg %p25
      %p32 = scmp.eq.s32.totalorder %s16, 1
      %p33 = por %p31, %p32
      %p34 = scmp.ne.s32.totalorder %s26, %s29
      %p35 = scmp.eq.s32.totalorder %s16, 0
      %p36 = por %p34, %p35
      %p37 = scmp.ne.s32.totalorder %s26, %s29
      %p38 = scmp.eq.s32.totalorder %s21, 1
      %p39 = por %p37, %p38
      %p40 = scmp.ne.s32.totalorder %s29, %s30
      %p41 = scmp.eq.s32.totalorder %s21, 0
      %p42 = por %p40, %p41
      %p43 = scmp.ne.s32.totalorder %s29, %s30
      %p44 = scmp.eq.s32.totalorder %s22, 1
      %p45 = por %p43, %p44
      %p47 = scmp.ne.s32.totalorder %s30, %s46
      %p48 = scmp.eq.s32.totalorder %s22, 0
      %p49 = por %p47, %p48
      %s51 = sadd.s32 %s50, 1
      %p54 = scmp.eq.s32.totalorder %s16, 1
      %p55 = scmp.ne.s32.totalorder %s50, %s52
      %p56 = scmp.eq.s32.totalorder %s16, 0
      %p57 = por %p55, %p56
      %p58 = scmp.ne.s32.totalorder %s50, %s52
      %p59 = scmp.eq.s32.totalorder %s21, 1
      %p60 = por %p58, %p59
      %p61 = scmp.ne.s32.totalorder %s52, %s53
      %p62 = scmp.eq.s32.totalorder %s21, 0
      %p63 = por %p61, %p62
      %p64 = scmp.ne.s32.totalorder %s52, %s53
      %p65 = scmp.eq.s32.totalorder %s22, 1
      %p66 = por %p64, %p65
      %p68 = scmp.ne.s32.totalorder %s53, %s67
      %p69 = scmp.eq.s32.totalorder %s22, 0
      %p70 = por %p68, %p69
      %s71 = ssub.s32 %s16, %s23
      %p72 = scmp.eq.s32.totalorder %s71, 0
      %s74 = sadd.s32 %s73, 1
      %s75 = scalar_select %p72, %s73, %s74
      %p78 = pneg %p72
      %p79 = scmp.eq.s32.totalorder %s16, 1
      %p80 = por %p78, %p79
      %p81 = scmp.ne.s32.totalorder %s73, %s76
      %p82 = scmp.eq.s32.totalorder %s16, 0
      %p83 = por %p81, %p82
      %p84 = scmp.ne.s32.totalorder %s73, %s76
      %p85 = scmp.eq.s32.totalorder %s21, 1
      %p86 = por %p84, %p85
      %p87 = scmp.ne.s32.totalorder %s76, %s77
      %p88 = scmp.eq.s32.totalorder %s21, 0
      %p89 = por %p87, %p88
      %p90 = scmp.ne.s32.totalorder %s76, %s77
      %p91 = scmp.eq.s32.totalorder %s22, 1
      %p92 = por %p90, %p91
      %p94 = scmp.ne.s32.totalorder %s77, %s93
      %p95 = scmp.eq.s32.totalorder %s22, 0
      %p96 = por %p94, %p95
      %s97 = ssub.s32 %s16, %s23
      %p98 = scmp.eq.s32.totalorder %s97, 0
      %s100 = sadd.s32 %s99, 1
      %s101 = scalar_select %p98, %s99, %s100
      %p104 = pneg %p98
      %p105 = scmp.eq.s32.totalorder %s16, 1
      %p106 = por %p104, %p105
      %p107 = scmp.ne.s32.totalorder %s99, %s102
      %p108 = scmp.eq.s32.totalorder %s16, 0
      %p109 = por %p107, %p108
      %p110 = scmp.ne.s32.totalorder %s99, %s102
      %p111 = scmp.eq.s32.totalorder %s21, 1
      %p112 = por %p110, %p111
      %p113 = scmp.ne.s32.totalorder %s102, %s103
      %p114 = scmp.eq.s32.totalorder %s21, 0
      %p115 = por %p113, %p114
      %p116 = scmp.ne.s32.totalorder %s102, %s103
      %p117 = scmp.eq.s32.totalorder %s22, 1
      %p118 = por %p116, %p117
      %p120 = scmp.ne.s32.totalorder %s103, %s119
      %p121 = scmp.eq.s32.totalorder %s22, 0
      %p122 = por %p120, %p121
      %s123 = ssub.s32 %s16, %s23
      %p124 = scmp.eq.s32.totalorder %s123, 0
      %s126 = sadd.s32 %s125, 1
      %s127 = scalar_select %p124, %s125, %s126
      %p130 = pneg %p124
      %p131 = scmp.eq.s32.totalorder %s16, 1
      %p132 = por %p130, %p131
      %p133 = scmp.ne.s32.totalorder %s125, %s128
      %p134 = scmp.eq.s32.totalorder %s16, 0
      %p135 = por %p133, %p134
      %p136 = scmp.ne.s32.totalorder %s125, %s128
      %p137 = scmp.eq.s32.totalorder %s21, 1
      %p138 = por %p136, %p137
      %p139 = scmp.ne.s32.totalorder %s128, %s129
      %p140 = scmp.eq.s32.totalorder %s21, 0
      %p141 = por %p139, %p140
      %p142 = scmp.ne.s32.totalorder %s128, %s129
      %p143 = scmp.eq.s32.totalorder %s22, 1
      %p144 = por %p142, %p143
      %p146 = scmp.ne.s32.totalorder %s129, %s145
      %p147 = scmp.eq.s32.totalorder %s22, 0
      %p148 = por %p146, %p147
      %s149 = ssub.s32 %s16, %s23
      %p150 = scmp.eq.s32.totalorder %s149, 0
      %s152 = sadd.s32 %s151, 1
      %s153 = scalar_select %p150, %s151, %s152
      %p156 = pneg %p150
      %p157 = scmp.eq.s32.totalorder %s16, 1
      %p158 = por %p156, %p157
      %p159 = scmp.ne.s32.totalorder %s151, %s154
      %p160 = scmp.eq.s32.totalorder %s16, 0
      %p161 = por %p159, %p160
      %p162 = scmp.ne.s32.totalorder %s151, %s154
      %p163 = scmp.eq.s32.totalorder %s21, 1
      %p164 = por %p162, %p163
      %p165 = scmp.ne.s32.totalorder %s154, %s155
      %p166 = scmp.eq.s32.totalorder %s21, 0
      %p167 = por %p165, %p166
      %p168 = scmp.ne.s32.totalorder %s154, %s155
      %p169 = scmp.eq.s32.totalorder %s22, 1
      %p170 = por %p168, %p169
      %p172 = scmp.ne.s32.totalorder %s155, %s171
      %p173 = scmp.eq.s32.totalorder %s22, 0
      %p174 = por %p172, %p173
      %s175 = ssub.s32 %s16, %s23
      %p176 = scmp.eq.s32.totalorder %s175, 0
      %s178 = sadd.s32 %s177, 1
      %s179 = scalar_select %p176, %s177, %s178
      %p182 = pneg %p176
      %p183 = scmp.eq.s32.totalorder %s16, 1
      %p184 = por %p182, %p183
      %p185 = scmp.ne.s32.totalorder %s177, %s180
      %p186 = scmp.eq.s32.totalorder %s16, 0
      %p187 = por %p185, %p186
      %p188 = scmp.ne.s32.totalorder %s177, %s180
      %p189 = scmp.eq.s32.totalorder %s21, 1
      %p190 = por %p188, %p189
      %p191 = scmp.ne.s32.totalorder %s180, %s181
      %p192 = scmp.eq.s32.totalorder %s21, 0
      %p193 = por %p191, %p192
      %p194 = scmp.ne.s32.totalorder %s180, %s181
      %p195 = scmp.eq.s32.totalorder %s22, 1
      %p196 = por %p194, %p195
      %p198 = scmp.ne.s32.totalorder %s181, %s197
      %p199 = scmp.eq.s32.totalorder %s22, 0
      %p200 = por %p198, %p199
      %s201 = ssub.s32 %s16, %s23
      %p202 = scmp.eq.s32.totalorder %s201, 0
      %s204 = sadd.s32 %s203, 1
      %s205 = scalar_select %p202, %s203, %s204
      %p208 = pneg %p202
      %p209 = scmp.eq.s32.totalorder %s16, 1
      %p210 = por %p208, %p209
      %p211 = scmp.ne.s32.totalorder %s203, %s206
      %p212 = scmp.eq.s32.totalorder %s16, 0
      %p213 = por %p211, %p212
      %p214 = scmp.ne.s32.totalorder %s203, %s206
      %p215 = scmp.eq.s32.totalorder %s21, 1
      %p216 = por %p214, %p215
      %p217 = scmp.ne.s32.totalorder %s206, %s207
      %p218 = scmp.eq.s32.totalorder %s21, 0
      %p219 = por %p217, %p218
      %p220 = scmp.ne.s32.totalorder %s206, %s207
      %p221 = scmp.eq.s32.totalorder %s22, 1
      %p222 = por %p220, %p221
      %p224 = scmp.ne.s32.totalorder %s207, %s223
      %p225 = scmp.eq.s32.totalorder %s22, 0
      %p226 = por %p224, %p225
      %p227 = scmp.le.s32.totalorder 1, %s16
      %p228 = scmp.lt.s32.totalorder %s16, 3
      %p229 = pnand %p227, %p228
      %p230 = pneg %p229
      // Predicated region
      $region9: #{tpu_custom_call.1} parent=5 // pred_check
        _
      $region10: #{tpu_custom_call.1} parent=5 // pred_check_branch
        %232 = sbr.rel (%p229) target = $region12
      $region11: #{tpu_custom_call.1} parent=5 // pred_region
        %s233 = ssub.s32 %s16, 1
        // Predicated region
        $region13: #{tpu_custom_call.1} parent=11 // pred_check
          %p234 = pneg %p63
        $region14: #{tpu_custom_call.1} parent=11 // pred_check_branch
          %236 = sbr.rel (%p234) target = $region16
        $region15: #{tpu_custom_call.1} parent=11 // pred_region
          _
        $region16: #{tpu_custom_call.1} parent=11 // pred_fallthru
          _
      $region12: #{tpu_custom_call.1} parent=5 // pred_fallthru
        _
      %p237 = scmp.lt.s32.totalorder %s16, 2
      // Predicated region
      $region17: #{tpu_custom_call.1} parent=5 // pred_check
        %p238 = pneg %p237
      $region18: #{tpu_custom_call.1} parent=5 // pred_check_branch
        %240 = sbr.rel (%p238) target = $region20
      $region19: #{tpu_custom_call.1} parent=5 // pred_region
        // Predicated region
        $region21: #{tpu_custom_call.1} parent=19 // pred_check
          %p241 = pneg %p36
        $region22: #{tpu_custom_call.1} parent=19 // pred_check_branch
          %243 = sbr.rel (%p241) target = $region24
        $region23: #{tpu_custom_call.1} parent=19 // pred_region
          %p244 = scmp.lt.s32.totalorder %s16, 1
          %s245 = scalar_select %p244, %s16, 1
          %s246 = smul.addr %s245, 4
          %s247 = scalar_lea.vmem %s0, %s246
        $region24: #{tpu_custom_call.1} parent=19 // pred_fallthru
          _
        // Predicated region
        $region25: #{tpu_custom_call.1} parent=19 // pred_check
          %p248 = pneg %p83
        $region26: #{tpu_custom_call.1} parent=19 // pred_check_branch
          %250 = sbr.rel (%p248) target = $region28
        $region27: #{tpu_custom_call.1} parent=19 // pred_region
          %p251 = scmp.lt.s32.totalorder %s16, 1
          %s252 = scalar_select %p251, %s16, 1
          %s253 = smul.addr %s252, 4
          %s254 = smul.addr %s253, 8
          %s255 = scalar_lea.vmem %s2, %s254
        $region28: #{tpu_custom_call.1} parent=19 // pred_fallthru
          _
        // Predicated region
        $region29: #{tpu_custom_call.1} parent=19 // pred_check
          %p256 = pneg %p109
        $region30: #{tpu_custom_call.1} parent=19 // pred_check_branch
          %258 = sbr.rel (%p256) target = $region32
        $region31: #{tpu_custom_call.1} parent=19 // pred_region
          %p259 = scmp.lt.s32.totalorder %s16, 1
          %s260 = scalar_select %p259, %s16, 1
          %s261 = smul.addr %s260, 4
          %s262 = smul.addr %s261, 8
          %s263 = scalar_lea.vmem %s3, %s262
        $region32: #{tpu_custom_call.1} parent=19 // pred_fallthru
          _
        // Predicated region
        $region33: #{tpu_custom_call.1} parent=19 // pred_check
          %p264 = pneg %p135
        $region34: #{tpu_custom_call.1} parent=19 // pred_check_branch
          %266 = sbr.rel (%p264) target = $region36
        $region35: #{tpu_custom_call.1} parent=19 // pred_region
          %s267 = sand.u32 %s125, 1
          %s268 = scalar_lea.sflag [#allocation3], %s267
          %s269 = sand.u32 %s125, 1
          %s270 = smul.addr %s269, 64
          %s271 = scalar_lea.vmem [#allocation2], %s270
          %273 = vsyncadd %s268, 0
          %s274 = smul.addr %s16, 8
          %s275 = smul.addr %s274, 8
          %s276 = scalar_lea.hbm %s4, %s275
          %s277 = sshll.u32 %s276, 4
          %s278 = int_to_ptr.hbm [resolvable:$true] %s277
          %s279 = sshll.u32 %s271, 4
          %s280 = int_to_ptr.vmem [resolvable:$true] %s279
          %285 = dma.hbm_to_vmem [thread:$0]  %s278, 1024, %s280, %s268, 128, 128, 8
        $region36: #{tpu_custom_call.1} parent=19 // pred_fallthru
          _
        // Predicated region
        $region37: #{tpu_custom_call.1} parent=19 // pred_check
          %p286 = pneg %p161
        $region38: #{tpu_custom_call.1} parent=19 // pred_check_branch
          %288 = sbr.rel (%p286) target = $region40
        $region39: #{tpu_custom_call.1} parent=19 // pred_region
          %p289 = scmp.lt.s32.totalorder %s16, 1
          %s290 = scalar_select %p289, %s16, 1
          %s291 = smul.addr %s290, 4
          %s292 = scalar_lea.vmem %s5, %s291
        $region40: #{tpu_custom_call.1} parent=19 // pred_fallthru
          _
        // Predicated region
        $region41: #{tpu_custom_call.1} parent=19 // pred_check
          %p293 = pneg %p187
        $region42: #{tpu_custom_call.1} parent=19 // pred_check_branch
          %295 = sbr.rel (%p293) target = $region44
        $region43: #{tpu_custom_call.1} parent=19 // pred_region
          %p296 = scmp.lt.s32.totalorder %s16, 1
          %s297 = scalar_select %p296, %s16, 1
          %s298 = smul.addr %s297, 4
          %s299 = scalar_lea.vmem %s6, %s298
        $region44: #{tpu_custom_call.1} parent=19 // pred_fallthru
          _
      $region20: #{tpu_custom_call.1} parent=5 // pred_fallthru
        _
      %p300 = scmp.le.s32.totalorder 1, %s16
      %p301 = scmp.lt.s32.totalorder %s16, 3
      %p302 = pnand %p300, %p301
      %p303 = pneg %p302
      // Predicated region
      $region45: #{tpu_custom_call.1} parent=5 // pred_check
        _
      $region46: #{tpu_custom_call.1} parent=5 // pred_check_branch
        %305 = sbr.rel (%p302) target = $region48
      $region47: #{tpu_custom_call.1} parent=5 // pred_region
        %s306 = ssub.s32 %s16, 1
        %s307 = sand.u32 %s128, 1
        %s308 = scalar_lea.sflag [#allocation3], %s307
        %s309 = sand.u32 %s128, 1
        %s310 = smul.addr %s309, 64
        %s311 = scalar_lea.vmem [#allocation2], %s310
        // Predicated region
        $region49: #{tpu_custom_call.1} parent=47 // pred_check
          %p312 = pneg %p141
        $region50: #{tpu_custom_call.1} parent=47 // pred_check_branch
          %314 = sbr.rel (%p312) target = $region52
        $region51: #{tpu_custom_call.1} parent=47 // pred_region
          %316 = dma.done %s308, 1024
        $region52: #{tpu_custom_call.1} parent=47 // pred_fallthru
          _
        %p317 = scmp.lt.s32.totalorder %s21, 1
        %s318 = scalar_select %p317, %s21, 1
        %s319 = smul.addr %s318, 4
        %s320 = scalar_lea.vmem %s0, %s319
        %p321 = pneg %p42
        %p322 = pneg %p39
        %p323 = pneg %p63
        %p324 = pneg %p60
        %p325 = scmp.lt.s32.totalorder %s21, 1
        %s326 = scalar_select %p325, %s21, 1
        %s327 = smul.addr %s326, 4
        %s328 = smul.addr %s327, 8
        %s329 = scalar_lea.vmem %s2, %s328
        %p330 = pneg %p89
        %p331 = pneg %p86
        %p332 = scmp.lt.s32.totalorder %s21, 1
        %s333 = scalar_select %p332, %s21, 1
        %s334 = smul.addr %s333, 4
        %s335 = smul.addr %s334, 8
        %s336 = scalar_lea.vmem %s3, %s335
        %p337 = pneg %p115
        %p338 = pneg %p112
        %s339 = sand.u32 %s128, 1
        %s340 = scalar_lea.sflag [#allocation3], %s339
        %s341 = sand.u32 %s128, 1
        %s342 = smul.addr %s341, 64
        %s343 = scalar_lea.vmem [#allocation2], %s342
        %p344 = pneg %p141
        %p345 = pneg %p138
        %p346 = scmp.lt.s32.totalorder %s21, 1
        %s347 = scalar_select %p346, %s21, 1
        %s348 = smul.addr %s347, 4
        %s349 = scalar_lea.vmem %s5, %s348
        %p350 = pneg %p167
        %p351 = pneg %p164
        %p352 = scmp.lt.s32.totalorder %s21, 1
        %s353 = scalar_select %p352, %s21, 1
        %s354 = smul.addr %s353, 4
        %s355 = scalar_lea.vmem %s6, %s354
        %p356 = pneg %p193
        %p357 = pneg %p190
        %p358 = pneg %p219
        %p359 = pneg %p216
        %s360 = sand.u32 %s206, 1
        %s361 = sand.u32 %s206, 1
        %s362 = smul.addr %s361, 8
        %s363 = scalar_lea.vmem [#allocation4], %s362
        %p364 = scmp.lt.s32.totalorder %s21, 1
        %s365 = scalar_select %p364, %s21, 1
        %s366 = smul.addr %s365, 4
        %s367 = scalar_lea.vmem %s0, %s366
        %p368 = scmp.lt.s32.totalorder %s21, 1
        %s369 = scalar_select %p368, %s21, 1
        %s370 = smul.addr %s369, 4
        %s371 = smul.addr %s370, 8
        %s372 = scalar_lea.vmem %s2, %s371
        %p373 = scmp.lt.s32.totalorder %s21, 1
        %s374 = scalar_select %p373, %s21, 1
        %s375 = smul.addr %s374, 4
        %s376 = smul.addr %s375, 8
        %s377 = scalar_lea.vmem %s3, %s376
        %p378 = scmp.lt.s32.totalorder %s21, 1
        %s379 = scalar_select %p378, %s21, 1
        %s380 = smul.addr %s379, 4
        %s381 = scalar_lea.vmem %s5, %s380
        %p382 = scmp.lt.s32.totalorder %s21, 1
        %s383 = scalar_select %p382, %s21, 1
        %s384 = smul.addr %s383, 4
        %s385 = scalar_lea.vmem %s6, %s384
        %v386 = vld [vmem:[%s367] sm:$0x7]
        %v387 = vld [vmem:[%s1] sm:$0xff]
        %v388 = vld [vmem:[%s1 + $0x8] sm:$0xff]
        %v389 = vld [vmem:[%s1 + $0x10] sm:$0xff]
        %v390 = vld [vmem:[%s1 + $0x18] sm:$0xff]
        %v391 = vld [vmem:[%s372] sm:$0xff]
        %v392 = vld [vmem:[%s372 + $0x8] sm:$0xff]
        %v393 = vld [vmem:[%s372 + $0x10] sm:$0xff]
        %v394 = vld [vmem:[%s372 + $0x18] sm:$0xff]
        %vm395 = vcmask 23552
        %v397 = vsel %vm395, %v391, 0
        %v400 = vsel %vm395, %v392, 0
        %v403 = vsel %vm395, %v393, 0
        %v406 = vsel %vm395, %v394, 0
        %vm408 = vcmask 1042432
        %v410 = vsel %vm408, %v386, 0
        %412 = vmatpush.msra.mxu0 0.0
        %413 = vmatpush.msra.mxu0 0.0
        %414 = vmatpush.msra.mxu0 0.0
        %415 = vmatpush.msra.mxu0 0.0
        %416 = vmatpush.msra.mxu0 0.0
        %417 = vmatpush.msra.mxu0 0.0
        %418 = vmatpush.msra.mxu0 0.0
        %419 = vmatpush.msra.mxu0 0.0
        %420 = vmatpush.msra.mxu0 0.0
        %421 = vmatpush.msra.mxu0 0.0
        %422 = vmatpush.msra.mxu0 0.0
        %423 = vmatpush.msra.mxu0 0.0
        %424 = vmatpush.msra.mxu0 0.0
        %425 = vmatpush.msra.mxu0 0.0
        %426 = vmatpush.msra.mxu0 0.0
        %427 = vmatpush.msra.mxu0 %v410
        %428 = vmatmul.f32.gmra.mxu0 %v397
        %v429 = vpop.f32.mrf.mxu0
        %v430 = vadd.f32 0.0, %v429
        %431 = vmatmul.f32.gmra.mxu0 %v400
        %v432 = vpop.f32.mrf.mxu0
        %v433 = vadd.f32 0.0, %v432
        %434 = vmatmul.f32.gmra.mxu0 %v403
        %v435 = vpop.f32.mrf.mxu0
        %v436 = vadd.f32 0.0, %v435
        %437 = vmatmul.f32.gmra.mxu0 %v406
        %v438 = vpop.f32.mrf.mxu0
        %v439 = vadd.f32 0.0, %v438
        %440 = vdwg.mxu0
        %442 = vset.pattern.permute.xlu0 0
        %443 = vperm.xlu0 %442, %v387
        %v444 = vpop.permute.xlu0 %443
        %447 = vset.pattern.permute.xlu0 0
        %448 = vperm.xlu0 %447, %v388
        %v449 = vpop.permute.xlu0 %448
        %452 = vset.pattern.permute.xlu0 0
        %453 = vperm.xlu0 %452, %v389
        %v454 = vpop.permute.xlu0 %453
        %457 = vset.pattern.permute.xlu0 0
        %458 = vperm.xlu0 %457, %v390
        %v459 = vpop.permute.xlu0 %458
        %v461 = vadd.f32 %v430, %v444
        %v462 = vadd.f32 %v433, %v449
        %v463 = vadd.f32 %v436, %v454
        %v464 = vadd.f32 %v439, %v459
        %465 = vset.pattern.permute.xlu0 1
        %466 = vperm.xlu0 %465, %v387
        %v467 = vpop.permute.xlu0 %466
        %469 = vset.pattern.permute.xlu0 1
        %470 = vperm.xlu0 %469, %v388
        %v471 = vpop.permute.xlu0 %470
        %473 = vset.pattern.permute.xlu0 1
        %474 = vperm.xlu0 %473, %v389
        %v475 = vpop.permute.xlu0 %474
        %477 = vset.pattern.permute.xlu0 1
        %478 = vperm.xlu0 %477, %v390
        %v479 = vpop.permute.xlu0 %478
        %v481 = vadd.f32 %v430, %v467
        %v482 = vadd.f32 %v433, %v471
        %v483 = vadd.f32 %v436, %v475
        %v484 = vadd.f32 %v439, %v479
        %v485 = vadd.f32 %v461, %v481
        %486 = vadd.xlane.f32.xlu0 %v485
        %v487 = vpop.xlane.xlu0 %486
        %v488 = vadd.f32 %v462, %v482
        %489 = vadd.xlane.f32.xlu0 %v488
        %v490 = vpop.xlane.xlu0 %489
        %v491 = vadd.f32 %v463, %v483
        %492 = vadd.xlane.f32.xlu0 %v491
        %v493 = vpop.xlane.xlu0 %492
        %v494 = vadd.f32 %v464, %v484
        %495 = vadd.xlane.f32.xlu0 %v494
        %v496 = vpop.xlane.xlu0 %495
        %v497 = vmul.f32 %v461, %v461
        %v498 = vmul.f32 %v481, %v481
        %v499 = vmul.f32 %v462, %v462
        %v500 = vmul.f32 %v482, %v482
        %v501 = vmul.f32 %v463, %v463
        %v502 = vmul.f32 %v483, %v483
        %v503 = vmul.f32 %v464, %v464
        %v504 = vmul.f32 %v484, %v484
        %v505 = vadd.f32 %v497, %v498
        %506 = vadd.xlane.f32.xlu0 %v505
        %v507 = vpop.xlane.xlu0 %506
        %v508 = vadd.f32 %v499, %v500
        %509 = vadd.xlane.f32.xlu0 %v508
        %v510 = vpop.xlane.xlu0 %509
        %v511 = vadd.f32 %v501, %v502
        %512 = vadd.xlane.f32.xlu0 %v511
        %v513 = vpop.xlane.xlu0 %512
        %v514 = vadd.f32 %v503, %v504
        %515 = vadd.xlane.f32.xlu0 %v514
        %v516 = vpop.xlane.xlu0 %515
        %v517 = vmul.f32 %v487, 0.00390625
        %v518 = vmul.f32 %v490, 0.00390625
        %v519 = vmul.f32 %v493, 0.00390625
        %v520 = vmul.f32 %v496, 0.00390625
        %v521 = vmul.f32 %v507, 0.00390625
        %v522 = vmul.f32 %v510, 0.00390625
        %v523 = vmul.f32 %v513, 0.00390625
        %v524 = vmul.f32 %v516, 0.00390625
        %v525 = vmul.f32 %v517, %v517
        %v526 = vmul.f32 %v518, %v518
        %v527 = vmul.f32 %v519, %v519
        %v528 = vmul.f32 %v520, %v520
        %v529 = vsub.f32 %v521, %v525
        %v530 = vsub.f32 %v522, %v526
        %v531 = vsub.f32 %v523, %v527
        %v532 = vsub.f32 %v524, %v528
        %v533 = vadd.f32 %v529, 1e-05
        %v534 = vadd.f32 %v530, 1e-05
        %v535 = vadd.f32 %v531, 1e-05
        %v536 = vadd.f32 %v532, 1e-05
        %v537 = vrsqrt.pop %v533
        %v538 = vmul.f32 %v537, %v533
        %v539 = vmul.f32 %v538, %v537
        %v540 = vmul.f32 0.5, %v539
        %v541 = vsub.f32 1.5, %v540
        %v542 = vmul.f32 %v537, %v541
        %vm543 = vweird.f32 %v533
        %vm544 = vweird.f32 %v537
        %vm545 = vmor %vm543, %vm544
        %v546 = vsel %vm545, %v537, %v542
        %v547 = vrsqrt.pop %v534
        %v548 = vmul.f32 %v547, %v534
        %v549 = vmul.f32 %v548, %v547
        %v550 = vmul.f32 0.5, %v549
        %v551 = vsub.f32 1.5, %v550
        %v552 = vmul.f32 %v547, %v551
        %vm553 = vweird.f32 %v534
        %vm554 = vweird.f32 %v547
        %vm555 = vmor %vm553, %vm554
        %v556 = vsel %vm555, %v547, %v552
        %v557 = vrsqrt.pop %v535
        %v558 = vmul.f32 %v557, %v535
        %v559 = vmul.f32 %v558, %v557
        %v560 = vmul.f32 0.5, %v559
        %v561 = vsub.f32 1.5, %v560
        %v562 = vmul.f32 %v557, %v561
        %vm563 = vweird.f32 %v535
        %vm564 = vweird.f32 %v557
        %vm565 = vmor %vm563, %vm564
        %v566 = vsel %vm565, %v557, %v562
        %v567 = vrsqrt.pop %v536
        %v568 = vmul.f32 %v567, %v536
        %v569 = vmul.f32 %v568, %v567
        %v570 = vmul.f32 0.5, %v569
        %v571 = vsub.f32 1.5, %v570
        %v572 = vmul.f32 %v567, %v571
        %vm573 = vweird.f32 %v536
        %vm574 = vweird.f32 %v567
        %vm575 = vmor %vm573, %vm574
        %v576 = vsel %vm575, %v567, %v572
        %v577 = vsub.f32 0.0, %v517
        %v578 = vsub.f32 0.0, %v518
        %v579 = vsub.f32 0.0, %v519
        %v580 = vsub.f32 0.0, %v520
        %v581 = vmul.f32 %v577, %v546
        %v582 = vmul.f32 %v578, %v556
        %v583 = vmul.f32 %v579, %v566
        %v584 = vmul.f32 %v580, %v576
        %v585 = vmul.f32 %v461, %v546
        %v586 = vmul.f32 %v481, %v546
        %v587 = vmul.f32 %v462, %v556
        %v588 = vmul.f32 %v482, %v556
        %v589 = vmul.f32 %v463, %v566
        %v590 = vmul.f32 %v483, %v566
        %v591 = vmul.f32 %v464, %v576
        %v592 = vmul.f32 %v484, %v576
        %v593 = vadd.f32 %v585, %v581
        %v594 = vadd.f32 %v586, %v581
        %v595 = vadd.f32 %v587, %v582
        %v596 = vadd.f32 %v588, %v582
        %v597 = vadd.f32 %v589, %v583
        %v598 = vadd.f32 %v590, %v583
        %v599 = vadd.f32 %v591, %v584
        %v600 = vadd.f32 %v592, %v584
        %v601 = vmax.f32 %v593, 0.0
        %v602 = vmax.f32 %v594, 0.0
        %v603 = vmax.f32 %v595, 0.0
        %v604 = vmax.f32 %v596, 0.0
        %v605 = vmax.f32 %v597, 0.0
        %v606 = vmax.f32 %v598, 0.0
        %v607 = vmax.f32 %v599, 0.0
        %v608 = vmax.f32 %v600, 0.0
        %v609 = vld [vmem:[%s377] sm:$0xff]
        %v610 = vld [vmem:[%s377 + $0x8] sm:$0xff]
        %v611 = vld [vmem:[%s377 + $0x10] sm:$0xff]
        %v612 = vld [vmem:[%s377 + $0x18] sm:$0xff]
        %vm613 = vcmask 261120
        %v615 = vsel %vm613, %v609, 0
        %v618 = vsel %vm613, %v610, 0
        %v621 = vsel %vm613, %v611, 0
        %v624 = vsel %vm613, %v612, 0
        %626 = vmatpush.msra.mxu0 0.0
        %627 = vmatpush.msra.mxu0 0.0
        %628 = vmatpush.msra.mxu0 0.0
        %629 = vmatpush.msra.mxu0 0.0
        %630 = vmatpush.msra.mxu0 0.0
        %631 = vmatpush.msra.mxu0 0.0
        %632 = vmatpush.msra.mxu0 0.0
        %633 = vmatpush.msra.mxu0 0.0
        %634 = vmatpush.msra.mxu0 0.0
        %635 = vmatpush.msra.mxu0 0.0
        %636 = vmatpush.msra.mxu0 0.0
        %637 = vmatpush.msra.mxu0 0.0
        %638 = vmatpush.msra.mxu0 %v607
        %639 = vmatpush.msra.mxu0 %v605
        %640 = vmatpush.msra.mxu0 %v603
        %641 = vmatpush.msra.mxu0 %v601
        %642 = vmatmul.f32.gmra.mxu0 %v615
        %v643 = vpop.f32.mrf.mxu0
        %v644 = vadd.f32 0.0, %v643
        %645 = vmatmul.f32.gmra.mxu0 %v618
        %v646 = vpop.f32.mrf.mxu0
        %v647 = vadd.f32 0.0, %v646
        %648 = vmatmul.f32.gmra.mxu0 %v621
        %v649 = vpop.f32.mrf.mxu0
        %v650 = vadd.f32 0.0, %v649
        %651 = vmatmul.f32.gmra.mxu0 %v624
        %v652 = vpop.f32.mrf.mxu0
        %v653 = vadd.f32 0.0, %v652
        %654 = vdwg.mxu0
        %655 = vmatpush.msra.mxu0 0.0
        %656 = vmatpush.msra.mxu0 0.0
        %657 = vmatpush.msra.mxu0 0.0
        %658 = vmatpush.msra.mxu0 0.0
        %659 = vmatpush.msra.mxu0 0.0
        %660 = vmatpush.msra.mxu0 0.0
        %661 = vmatpush.msra.mxu0 0.0
        %662 = vmatpush.msra.mxu0 0.0
        %663 = vmatpush.msra.mxu0 0.0
        %664 = vmatpush.msra.mxu0 0.0
        %665 = vmatpush.msra.mxu0 0.0
        %666 = vmatpush.msra.mxu0 0.0
        %667 = vmatpush.msra.mxu0 %v608
        %668 = vmatpush.msra.mxu0 %v606
        %669 = vmatpush.msra.mxu0 %v604
        %670 = vmatpush.msra.mxu0 %v602
        %671 = vmatmul.f32.gmra.mxu0 %v615
        %v672 = vpop.f32.mrf.mxu0
        %v673 = vadd.f32 0.0, %v672
        %674 = vmatmul.f32.gmra.mxu0 %v618
        %v675 = vpop.f32.mrf.mxu0
        %v676 = vadd.f32 0.0, %v675
        %677 = vmatmul.f32.gmra.mxu0 %v621
        %v678 = vpop.f32.mrf.mxu0
        %v679 = vadd.f32 0.0, %v678
        %680 = vmatmul.f32.gmra.mxu0 %v624
        %v681 = vpop.f32.mrf.mxu0
        %v682 = vadd.f32 0.0, %v681
        %683 = vdwg.mxu0
        %v684 = vadd.f32 %v644, %v673
        %685 = vadd.xlane.f32.xlu0 %v684
        %v686 = vpop.xlane.xlu0 %685
        %v687 = vadd.f32 %v647, %v676
        %688 = vadd.xlane.f32.xlu0 %v687
        %v689 = vpop.xlane.xlu0 %688
        %v690 = vadd.f32 %v650, %v679
        %691 = vadd.xlane.f32.xlu0 %v690
        %v692 = vpop.xlane.xlu0 %691
        %v693 = vadd.f32 %v653, %v682
        %694 = vadd.xlane.f32.xlu0 %v693
        %v695 = vpop.xlane.xlu0 %694
        %v696 = vmul.f32 %v644, %v644
        %v697 = vmul.f32 %v673, %v673
        %v698 = vmul.f32 %v647, %v647
        %v699 = vmul.f32 %v676, %v676
        %v700 = vmul.f32 %v650, %v650
        %v701 = vmul.f32 %v679, %v679
        %v702 = vmul.f32 %v653, %v653
        %v703 = vmul.f32 %v682, %v682
        %v704 = vadd.f32 %v696, %v697
        %705 = vadd.xlane.f32.xlu0 %v704
        %v706 = vpop.xlane.xlu0 %705
        %v707 = vadd.f32 %v698, %v699
        %708 = vadd.xlane.f32.xlu0 %v707
        %v709 = vpop.xlane.xlu0 %708
        %v710 = vadd.f32 %v700, %v701
        %711 = vadd.xlane.f32.xlu0 %v710
        %v712 = vpop.xlane.xlu0 %711
        %v713 = vadd.f32 %v702, %v703
        %714 = vadd.xlane.f32.xlu0 %v713
        %v715 = vpop.xlane.xlu0 %714
        %v716 = vmul.f32 %v686, 0.00390625
        %v717 = vmul.f32 %v689, 0.00390625
        %v718 = vmul.f32 %v692, 0.00390625
        %v719 = vmul.f32 %v695, 0.00390625
        %v720 = vmul.f32 %v706, 0.00390625
        %v721 = vmul.f32 %v709, 0.00390625
        %v722 = vmul.f32 %v712, 0.00390625
        %v723 = vmul.f32 %v715, 0.00390625
        %v724 = vmul.f32 %v716, %v716
        %v725 = vmul.f32 %v717, %v717
        %v726 = vmul.f32 %v718, %v718
        %v727 = vmul.f32 %v719, %v719
        %v728 = vsub.f32 %v720, %v724
        %v729 = vsub.f32 %v721, %v725
        %v730 = vsub.f32 %v722, %v726
        %v731 = vsub.f32 %v723, %v727
        %v732 = vadd.f32 %v728, 1e-05
        %v733 = vadd.f32 %v729, 1e-05
        %v734 = vadd.f32 %v730, 1e-05
        %v735 = vadd.f32 %v731, 1e-05
        %v736 = vrsqrt.pop %v732
        %v737 = vmul.f32 %v736, %v732
        %v738 = vmul.f32 %v737, %v736
        %v739 = vmul.f32 0.5, %v738
        %v740 = vsub.f32 1.5, %v739
        %v741 = vmul.f32 %v736, %v740
        %vm742 = vweird.f32 %v732
        %vm743 = vweird.f32 %v736
        %vm744 = vmor %vm742, %vm743
        %v745 = vsel %vm744, %v736, %v741
        %v746 = vrsqrt.pop %v733
        %v747 = vmul.f32 %v746, %v733
        %v748 = vmul.f32 %v747, %v746
        %v749 = vmul.f32 0.5, %v748
        %v750 = vsub.f32 1.5, %v749
        %v751 = vmul.f32 %v746, %v750
        %vm752 = vweird.f32 %v733
        %vm753 = vweird.f32 %v746
        %vm754 = vmor %vm752, %vm753
        %v755 = vsel %vm754, %v746, %v751
        %v756 = vrsqrt.pop %v734
        %v757 = vmul.f32 %v756, %v734
        %v758 = vmul.f32 %v757, %v756
        %v759 = vmul.f32 0.5, %v758
        %v760 = vsub.f32 1.5, %v759
        %v761 = vmul.f32 %v756, %v760
        %vm762 = vweird.f32 %v734
        %vm763 = vweird.f32 %v756
        %vm764 = vmor %vm762, %vm763
        %v765 = vsel %vm764, %v756, %v761
        %v766 = vrsqrt.pop %v735
        %v767 = vmul.f32 %v766, %v735
        %v768 = vmul.f32 %v767, %v766
        %v769 = vmul.f32 0.5, %v768
        %v770 = vsub.f32 1.5, %v769
        %v771 = vmul.f32 %v766, %v770
        %vm772 = vweird.f32 %v735
        %vm773 = vweird.f32 %v766
        %vm774 = vmor %vm772, %vm773
        %v775 = vsel %vm774, %v766, %v771
        %v776 = vsub.f32 0.0, %v716
        %v777 = vsub.f32 0.0, %v717
        %v778 = vsub.f32 0.0, %v718
        %v779 = vsub.f32 0.0, %v719
        %v780 = vmul.f32 %v776, %v745
        %v781 = vmul.f32 %v777, %v755
        %v782 = vmul.f32 %v778, %v765
        %v783 = vmul.f32 %v779, %v775
        %v784 = vmul.f32 %v644, %v745
        %v785 = vmul.f32 %v673, %v745
        %v786 = vmul.f32 %v647, %v755
        %v787 = vmul.f32 %v676, %v755
        %v788 = vmul.f32 %v650, %v765
        %v789 = vmul.f32 %v679, %v765
        %v790 = vmul.f32 %v653, %v775
        %v791 = vmul.f32 %v682, %v775
        %v792 = vadd.f32 %v784, %v780
        %v793 = vadd.f32 %v785, %v780
        %v794 = vadd.f32 %v786, %v781
        %v795 = vadd.f32 %v787, %v781
        %v796 = vadd.f32 %v788, %v782
        %v797 = vadd.f32 %v789, %v782
        %v798 = vadd.f32 %v790, %v783
        %v799 = vadd.f32 %v791, %v783
        %v800 = vmax.f32 %v792, 0.0
        %v801 = vmax.f32 %v793, 0.0
        %v802 = vmax.f32 %v794, 0.0
        %v803 = vmax.f32 %v795, 0.0
        %v804 = vmax.f32 %v796, 0.0
        %v805 = vmax.f32 %v797, 0.0
        %v806 = vmax.f32 %v798, 0.0
        %v807 = vmax.f32 %v799, 0.0
        %v808 = vld [vmem:[%s311] sm:$0xff]
        %v809 = vld [vmem:[%s311 + $0x8] sm:$0xff]
        %v810 = vld [vmem:[%s311 + $0x10] sm:$0xff]
        %v811 = vld [vmem:[%s311 + $0x18] sm:$0xff]
        %v813 = vsel %vm613, %v808, 0
        %v816 = vsel %vm613, %v809, 0
        %v819 = vsel %vm613, %v810, 0
        %v822 = vsel %vm613, %v811, 0
        %824 = vmatpush.msra.mxu0 0.0
        %825 = vmatpush.msra.mxu0 0.0
        %826 = vmatpush.msra.mxu0 0.0
        %827 = vmatpush.msra.mxu0 0.0
        %828 = vmatpush.msra.mxu0 0.0
        %829 = vmatpush.msra.mxu0 0.0
        %830 = vmatpush.msra.mxu0 0.0
        %831 = vmatpush.msra.mxu0 0.0
        %832 = vmatpush.msra.mxu0 0.0
        %833 = vmatpush.msra.mxu0 0.0
        %834 = vmatpush.msra.mxu0 0.0
        %835 = vmatpush.msra.mxu0 0.0
        %836 = vmatpush.msra.mxu0 %v806
        %837 = vmatpush.msra.mxu0 %v804
        %838 = vmatpush.msra.mxu0 %v802
        %839 = vmatpush.msra.mxu0 %v800
        %840 = vmatmul.f32.gmra.mxu0 %v813
        %v841 = vpop.f32.mrf.mxu0
        %v842 = vadd.f32 0.0, %v841
        %843 = vmatmul.f32.gmra.mxu0 %v816
        %v844 = vpop.f32.mrf.mxu0
        %v845 = vadd.f32 0.0, %v844
        %846 = vmatmul.f32.gmra.mxu0 %v819
        %v847 = vpop.f32.mrf.mxu0
        %v848 = vadd.f32 0.0, %v847
        %849 = vmatmul.f32.gmra.mxu0 %v822
        %v850 = vpop.f32.mrf.mxu0
        %v851 = vadd.f32 0.0, %v850
        %852 = vdwg.mxu0
        %853 = vmatpush.msra.mxu0 0.0
        %854 = vmatpush.msra.mxu0 0.0
        %855 = vmatpush.msra.mxu0 0.0
        %856 = vmatpush.msra.mxu0 0.0
        %857 = vmatpush.msra.mxu0 0.0
        %858 = vmatpush.msra.mxu0 0.0
        %859 = vmatpush.msra.mxu0 0.0
        %860 = vmatpush.msra.mxu0 0.0
        %861 = vmatpush.msra.mxu0 0.0
        %862 = vmatpush.msra.mxu0 0.0
        %863 = vmatpush.msra.mxu0 0.0
        %864 = vmatpush.msra.mxu0 0.0
        %865 = vmatpush.msra.mxu0 %v807
        %866 = vmatpush.msra.mxu0 %v805
        %867 = vmatpush.msra.mxu0 %v803
        %868 = vmatpush.msra.mxu0 %v801
        %869 = vmatmul.f32.gmra.mxu0 %v813
        %v870 = vpop.f32.mrf.mxu0
        %v871 = vadd.f32 0.0, %v870
        %872 = vmatmul.f32.gmra.mxu0 %v816
        %v873 = vpop.f32.mrf.mxu0
        %v874 = vadd.f32 0.0, %v873
        %875 = vmatmul.f32.gmra.mxu0 %v819
        %v876 = vpop.f32.mrf.mxu0
        %v877 = vadd.f32 0.0, %v876
        %878 = vmatmul.f32.gmra.mxu0 %v822
        %v879 = vpop.f32.mrf.mxu0
        %v880 = vadd.f32 0.0, %v879
        %881 = vdwg.mxu0
        %v882 = vadd.f32 %v842, %v871
        %883 = vadd.xlane.f32.xlu0 %v882
        %v884 = vpop.xlane.xlu0 %883
        %v885 = vadd.f32 %v845, %v874
        %886 = vadd.xlane.f32.xlu0 %v885
        %v887 = vpop.xlane.xlu0 %886
        %v888 = vadd.f32 %v848, %v877
        %889 = vadd.xlane.f32.xlu0 %v888
        %v890 = vpop.xlane.xlu0 %889
        %v891 = vadd.f32 %v851, %v880
        %892 = vadd.xlane.f32.xlu0 %v891
        %v893 = vpop.xlane.xlu0 %892
        %v894 = vmul.f32 %v842, %v842
        %v895 = vmul.f32 %v871, %v871
        %v896 = vmul.f32 %v845, %v845
        %v897 = vmul.f32 %v874, %v874
        %v898 = vmul.f32 %v848, %v848
        %v899 = vmul.f32 %v877, %v877
        %v900 = vmul.f32 %v851, %v851
        %v901 = vmul.f32 %v880, %v880
        %v902 = vadd.f32 %v894, %v895
        %903 = vadd.xlane.f32.xlu0 %v902
        %v904 = vpop.xlane.xlu0 %903
        %v905 = vadd.f32 %v896, %v897
        %906 = vadd.xlane.f32.xlu0 %v905
        %v907 = vpop.xlane.xlu0 %906
        %v908 = vadd.f32 %v898, %v899
        %909 = vadd.xlane.f32.xlu0 %v908
        %v910 = vpop.xlane.xlu0 %909
        %v911 = vadd.f32 %v900, %v901
        %912 = vadd.xlane.f32.xlu0 %v911
        %v913 = vpop.xlane.xlu0 %912
        %v914 = vmul.f32 %v884, 0.00390625
        %v915 = vmul.f32 %v887, 0.00390625
        %v916 = vmul.f32 %v890, 0.00390625
        %v917 = vmul.f32 %v893, 0.00390625
        %v918 = vmul.f32 %v904, 0.00390625
        %v919 = vmul.f32 %v907, 0.00390625
        %v920 = vmul.f32 %v910, 0.00390625
        %v921 = vmul.f32 %v913, 0.00390625
        %v922 = vmul.f32 %v914, %v914
        %v923 = vmul.f32 %v915, %v915
        %v924 = vmul.f32 %v916, %v916
        %v925 = vmul.f32 %v917, %v917
        %v926 = vsub.f32 %v918, %v922
        %v927 = vsub.f32 %v919, %v923
        %v928 = vsub.f32 %v920, %v924
        %v929 = vsub.f32 %v921, %v925
        %v930 = vadd.f32 %v926, 1e-05
        %v931 = vadd.f32 %v927, 1e-05
        %v932 = vadd.f32 %v928, 1e-05
        %v933 = vadd.f32 %v929, 1e-05
        %v934 = vrsqrt.pop %v930
        %v935 = vmul.f32 %v934, %v930
        %v936 = vmul.f32 %v935, %v934
        %v937 = vmul.f32 0.5, %v936
        %v938 = vsub.f32 1.5, %v937
        %v939 = vmul.f32 %v934, %v938
        %vm940 = vweird.f32 %v930
        %vm941 = vweird.f32 %v934
        %vm942 = vmor %vm940, %vm941
        %v943 = vsel %vm942, %v934, %v939
        %v944 = vrsqrt.pop %v931
        %v945 = vmul.f32 %v944, %v931
        %v946 = vmul.f32 %v945, %v944
        %v947 = vmul.f32 0.5, %v946
        %v948 = vsub.f32 1.5, %v947
        %v949 = vmul.f32 %v944, %v948
        %vm950 = vweird.f32 %v931
        %vm951 = vweird.f32 %v944
        %vm952 = vmor %vm950, %vm951
        %v953 = vsel %vm952, %v944, %v949
        %v954 = vrsqrt.pop %v932
        %v955 = vmul.f32 %v954, %v932
        %v956 = vmul.f32 %v955, %v954
        %v957 = vmul.f32 0.5, %v956
        %v958 = vsub.f32 1.5, %v957
        %v959 = vmul.f32 %v954, %v958
        %vm960 = vweird.f32 %v932
        %vm961 = vweird.f32 %v954
        %vm962 = vmor %vm960, %vm961
        %v963 = vsel %vm962, %v954, %v959
        %v964 = vrsqrt.pop %v933
        %v965 = vmul.f32 %v964, %v933
        %v966 = vmul.f32 %v965, %v964
        %v967 = vmul.f32 0.5, %v966
        %v968 = vsub.f32 1.5, %v967
        %v969 = vmul.f32 %v964, %v968
        %vm970 = vweird.f32 %v933
        %vm971 = vweird.f32 %v964
        %vm972 = vmor %vm970, %vm971
        %v973 = vsel %vm972, %v964, %v969
        %v974 = vsub.f32 0.0, %v914
        %v975 = vsub.f32 0.0, %v915
        %v976 = vsub.f32 0.0, %v916
        %v977 = vsub.f32 0.0, %v917
        %v978 = vmul.f32 %v974, %v943
        %v979 = vmul.f32 %v975, %v953
        %v980 = vmul.f32 %v976, %v963
        %v981 = vmul.f32 %v977, %v973
        %v982 = vmul.f32 %v842, %v943
        %v983 = vmul.f32 %v871, %v943
        %v984 = vmul.f32 %v845, %v953
        %v985 = vmul.f32 %v874, %v953
        %v986 = vmul.f32 %v848, %v963
        %v987 = vmul.f32 %v877, %v963
        %v988 = vmul.f32 %v851, %v973
        %v989 = vmul.f32 %v880, %v973
        %v990 = vadd.f32 %v982, %v978
        %v991 = vadd.f32 %v983, %v978
        %v992 = vadd.f32 %v984, %v979
        %v993 = vadd.f32 %v985, %v979
        %v994 = vadd.f32 %v986, %v980
        %v995 = vadd.f32 %v987, %v980
        %v996 = vadd.f32 %v988, %v981
        %v997 = vadd.f32 %v989, %v981
        %v998 = vmax.f32 %v990, 0.0
        %v999 = vmax.f32 %v991, 0.0
        %v1000 = vmax.f32 %v992, 0.0
        %v1001 = vmax.f32 %v993, 0.0
        %v1002 = vmax.f32 %v994, 0.0
        %v1003 = vmax.f32 %v995, 0.0
        %v1004 = vmax.f32 %v996, 0.0
        %v1005 = vmax.f32 %v997, 0.0
        %s1006 = scalar_lea.vmem %s311, 32 [#allocation2]
        %v1007 = vld [vmem:[%s1006] sm:$0xff]
        %v1008 = vld [vmem:[%s1006 + $0x8] sm:$0xff]
        %v1009 = vld [vmem:[%s1006 + $0x10] sm:$0xff]
        %v1010 = vld [vmem:[%s1006 + $0x18] sm:$0xff]
        %v1012 = vsel %vm613, %v1007, 0
        %v1015 = vsel %vm613, %v1008, 0
        %v1018 = vsel %vm613, %v1009, 0
        %v1021 = vsel %vm613, %v1010, 0
        %1023 = vmatpush.msra.mxu0 0.0
        %1024 = vmatpush.msra.mxu0 0.0
        %1025 = vmatpush.msra.mxu0 0.0
        %1026 = vmatpush.msra.mxu0 0.0
        %1027 = vmatpush.msra.mxu0 0.0
        %1028 = vmatpush.msra.mxu0 0.0
        %1029 = vmatpush.msra.mxu0 0.0
        %1030 = vmatpush.msra.mxu0 0.0
        %1031 = vmatpush.msra.mxu0 0.0
        %1032 = vmatpush.msra.mxu0 0.0
        %1033 = vmatpush.msra.mxu0 0.0
        %1034 = vmatpush.msra.mxu0 0.0
        %1035 = vmatpush.msra.mxu0 %v1004
        %1036 = vmatpush.msra.mxu0 %v1002
        %1037 = vmatpush.msra.mxu0 %v1000
        %1038 = vmatpush.msra.mxu0 %v998
        %1039 = vmatmul.f32.gmra.mxu0 %v1012
        %v1040 = vpop.f32.mrf.mxu0
        %v1041 = vadd.f32 0.0, %v1040
        %1042 = vmatmul.f32.gmra.mxu0 %v1015
        %v1043 = vpop.f32.mrf.mxu0
        %v1044 = vadd.f32 0.0, %v1043
        %1045 = vmatmul.f32.gmra.mxu0 %v1018
        %v1046 = vpop.f32.mrf.mxu0
        %v1047 = vadd.f32 0.0, %v1046
        %1048 = vmatmul.f32.gmra.mxu0 %v1021
        %v1049 = vpop.f32.mrf.mxu0
        %v1050 = vadd.f32 0.0, %v1049
        %1051 = vdwg.mxu0
        %1052 = vmatpush.msra.mxu0 0.0
        %1053 = vmatpush.msra.mxu0 0.0
        %1054 = vmatpush.msra.mxu0 0.0
        %1055 = vmatpush.msra.mxu0 0.0
        %1056 = vmatpush.msra.mxu0 0.0
        %1057 = vmatpush.msra.mxu0 0.0
        %1058 = vmatpush.msra.mxu0 0.0
        %1059 = vmatpush.msra.mxu0 0.0
        %1060 = vmatpush.msra.mxu0 0.0
        %1061 = vmatpush.msra.mxu0 0.0
        %1062 = vmatpush.msra.mxu0 0.0
        %1063 = vmatpush.msra.mxu0 0.0
        %1064 = vmatpush.msra.mxu0 %v1005
        %1065 = vmatpush.msra.mxu0 %v1003
        %1066 = vmatpush.msra.mxu0 %v1001
        %1067 = vmatpush.msra.mxu0 %v999
        %1068 = vmatmul.f32.gmra.mxu0 %v1012
        %v1069 = vpop.f32.mrf.mxu0
        %v1070 = vadd.f32 0.0, %v1069
        %1071 = vmatmul.f32.gmra.mxu0 %v1015
        %v1072 = vpop.f32.mrf.mxu0
        %v1073 = vadd.f32 0.0, %v1072
        %1074 = vmatmul.f32.gmra.mxu0 %v1018
        %v1075 = vpop.f32.mrf.mxu0
        %v1076 = vadd.f32 0.0, %v1075
        %1077 = vmatmul.f32.gmra.mxu0 %v1021
        %v1078 = vpop.f32.mrf.mxu0
        %v1079 = vadd.f32 0.0, %v1078
        %1080 = vdwg.mxu0
        %v1081 = vadd.f32 %v1041, %v1070
        %1082 = vadd.xlane.f32.xlu0 %v1081
        %v1083 = vpop.xlane.xlu0 %1082
        %v1084 = vadd.f32 %v1044, %v1073
        %1085 = vadd.xlane.f32.xlu0 %v1084
        %v1086 = vpop.xlane.xlu0 %1085
        %v1087 = vadd.f32 %v1047, %v1076
        %1088 = vadd.xlane.f32.xlu0 %v1087
        %v1089 = vpop.xlane.xlu0 %1088
        %v1090 = vadd.f32 %v1050, %v1079
        %1091 = vadd.xlane.f32.xlu0 %v1090
        %v1092 = vpop.xlane.xlu0 %1091
        %v1093 = vmul.f32 %v1041, %v1041
        %v1094 = vmul.f32 %v1070, %v1070
        %v1095 = vmul.f32 %v1044, %v1044
        %v1096 = vmul.f32 %v1073, %v1073
        %v1097 = vmul.f32 %v1047, %v1047
        %v1098 = vmul.f32 %v1076, %v1076
        %v1099 = vmul.f32 %v1050, %v1050
        %v1100 = vmul.f32 %v1079, %v1079
        %v1101 = vadd.f32 %v1093, %v1094
        %1102 = vadd.xlane.f32.xlu0 %v1101
        %v1103 = vpop.xlane.xlu0 %1102
        %v1104 = vadd.f32 %v1095, %v1096
        %1105 = vadd.xlane.f32.xlu0 %v1104
        %v1106 = vpop.xlane.xlu0 %1105
        %v1107 = vadd.f32 %v1097, %v1098
        %1108 = vadd.xlane.f32.xlu0 %v1107
        %v1109 = vpop.xlane.xlu0 %1108
        %v1110 = vadd.f32 %v1099, %v1100
        %1111 = vadd.xlane.f32.xlu0 %v1110
        %v1112 = vpop.xlane.xlu0 %1111
        %v1113 = vmul.f32 %v1083, 0.00390625
        %v1114 = vmul.f32 %v1086, 0.00390625
        %v1115 = vmul.f32 %v1089, 0.00390625
        %v1116 = vmul.f32 %v1092, 0.00390625
        %v1117 = vmul.f32 %v1103, 0.00390625
        %v1118 = vmul.f32 %v1106, 0.00390625
        %v1119 = vmul.f32 %v1109, 0.00390625
        %v1120 = vmul.f32 %v1112, 0.00390625
        %v1121 = vmul.f32 %v1113, %v1113
        %v1122 = vmul.f32 %v1114, %v1114
        %v1123 = vmul.f32 %v1115, %v1115
        %v1124 = vmul.f32 %v1116, %v1116
        %v1125 = vsub.f32 %v1117, %v1121
        %v1126 = vsub.f32 %v1118, %v1122
        %v1127 = vsub.f32 %v1119, %v1123
        %v1128 = vsub.f32 %v1120, %v1124
        %v1129 = vadd.f32 %v1125, 1e-05
        %v1130 = vadd.f32 %v1126, 1e-05
        %v1131 = vadd.f32 %v1127, 1e-05
        %v1132 = vadd.f32 %v1128, 1e-05
        %v1133 = vrsqrt.pop %v1129
        %v1134 = vmul.f32 %v1133, %v1129
        %v1135 = vmul.f32 %v1134, %v1133
        %v1136 = vmul.f32 0.5, %v1135
        %v1137 = vsub.f32 1.5, %v1136
        %v1138 = vmul.f32 %v1133, %v1137
        %vm1139 = vweird.f32 %v1129
        %vm1140 = vweird.f32 %v1133
        %vm1141 = vmor %vm1139, %vm1140
        %v1142 = vsel %vm1141, %v1133, %v1138
        %v1143 = vrsqrt.pop %v1130
        %v1144 = vmul.f32 %v1143, %v1130
        %v1145 = vmul.f32 %v1144, %v1143
        %v1146 = vmul.f32 0.5, %v1145
        %v1147 = vsub.f32 1.5, %v1146
        %v1148 = vmul.f32 %v1143, %v1147
        %vm1149 = vweird.f32 %v1130
        %vm1150 = vweird.f32 %v1143
        %vm1151 = vmor %vm1149, %vm1150
        %v1152 = vsel %vm1151, %v1143, %v1148
        %v1153 = vrsqrt.pop %v1131
        %v1154 = vmul.f32 %v1153, %v1131
        %v1155 = vmul.f32 %v1154, %v1153
        %v1156 = vmul.f32 0.5, %v1155
        %v1157 = vsub.f32 1.5, %v1156
        %v1158 = vmul.f32 %v1153, %v1157
        %vm1159 = vweird.f32 %v1131
        %vm1160 = vweird.f32 %v1153
        %vm1161 = vmor %vm1159, %vm1160
        %v1162 = vsel %vm1161, %v1153, %v1158
        %v1163 = vrsqrt.pop %v1132
        %v1164 = vmul.f32 %v1163, %v1132
        %v1165 = vmul.f32 %v1164, %v1163
        %v1166 = vmul.f32 0.5, %v1165
        %v1167 = vsub.f32 1.5, %v1166
        %v1168 = vmul.f32 %v1163, %v1167
        %vm1169 = vweird.f32 %v1132
        %vm1170 = vweird.f32 %v1163
        %vm1171 = vmor %vm1169, %vm1170
        %v1172 = vsel %vm1171, %v1163, %v1168
        %v1173 = vsub.f32 0.0, %v1113
        %v1174 = vsub.f32 0.0, %v1114
        %v1175 = vsub.f32 0.0, %v1115
        %v1176 = vsub.f32 0.0, %v1116
        %v1177 = vmul.f32 %v1173, %v1142
        %v1178 = vmul.f32 %v1174, %v1152
        %v1179 = vmul.f32 %v1175, %v1162
        %v1180 = vmul.f32 %v1176, %v1172
        %v1181 = vmul.f32 %v1041, %v1142
        %v1182 = vmul.f32 %v1070, %v1142
        %v1183 = vmul.f32 %v1044, %v1152
        %v1184 = vmul.f32 %v1073, %v1152
        %v1185 = vmul.f32 %v1047, %v1162
        %v1186 = vmul.f32 %v1076, %v1162
        %v1187 = vmul.f32 %v1050, %v1172
        %v1188 = vmul.f32 %v1079, %v1172
        %v1189 = vadd.f32 %v1181, %v1177
        %v1190 = vadd.f32 %v1182, %v1177
        %v1191 = vadd.f32 %v1183, %v1178
        %v1192 = vadd.f32 %v1184, %v1178
        %v1193 = vadd.f32 %v1185, %v1179
        %v1194 = vadd.f32 %v1186, %v1179
        %v1195 = vadd.f32 %v1187, %v1180
        %v1196 = vadd.f32 %v1188, %v1180
        %v1197 = vmax.f32 %v1189, 0.0
        %v1198 = vmax.f32 %v1190, 0.0
        %v1199 = vmax.f32 %v1191, 0.0
        %v1200 = vmax.f32 %v1192, 0.0
        %v1201 = vmax.f32 %v1193, 0.0
        %v1202 = vmax.f32 %v1194, 0.0
        %v1203 = vmax.f32 %v1195, 0.0
        %v1204 = vmax.f32 %v1196, 0.0
        %v1205 = vld [vmem:[%s381] sm:$0x7]
        %v1206 = vld [vmem:[%s385] sm:$0x7]
        %1208 = vset.pattern.permute.xlu0 0
        %1209 = vperm.xlu0 %1208, %v1206
        %v1210 = vpop.permute.xlu0 %1209
        %v1213 = vsel %vm613, %v1205, 0
        %1215 = vmatpush.msra.mxu0 0.0
        %1216 = vmatpush.msra.mxu0 0.0
        %1217 = vmatpush.msra.mxu0 0.0
        %1218 = vmatpush.msra.mxu0 0.0
        %1219 = vmatpush.msra.mxu0 0.0
        %1220 = vmatpush.msra.mxu0 0.0
        %1221 = vmatpush.msra.mxu0 0.0
        %1222 = vmatpush.msra.mxu0 0.0
        %1223 = vmatpush.msra.mxu0 0.0
        %1224 = vmatpush.msra.mxu0 0.0
        %1225 = vmatpush.msra.mxu0 0.0
        %1226 = vmatpush.msra.mxu0 0.0
        %1227 = vmatpush.msra.mxu0 %v1203
        %1228 = vmatpush.msra.mxu0 %v1201
        %1229 = vmatpush.msra.mxu0 %v1199
        %1230 = vmatpush.msra.mxu0 %v1197
        %1231 = vmatmul.f32.gmra.mxu0 %v1213
        %v1232 = vpop.f32.mrf.mxu0
        %v1233 = vadd.f32 %v1210, %v1232
        %1234 = vdwg.mxu0
        %1235 = vmatpush.msra.mxu0 0.0
        %1236 = vmatpush.msra.mxu0 0.0
        %1237 = vmatpush.msra.mxu0 0.0
        %1238 = vmatpush.msra.mxu0 0.0
        %1239 = vmatpush.msra.mxu0 0.0
        %1240 = vmatpush.msra.mxu0 0.0
        %1241 = vmatpush.msra.mxu0 0.0
        %1242 = vmatpush.msra.mxu0 0.0
        %1243 = vmatpush.msra.mxu0 0.0
        %1244 = vmatpush.msra.mxu0 0.0
        %1245 = vmatpush.msra.mxu0 0.0
        %1246 = vmatpush.msra.mxu0 0.0
        %1247 = vmatpush.msra.mxu0 %v1204
        %1248 = vmatpush.msra.mxu0 %v1202
        %1249 = vmatpush.msra.mxu0 %v1200
        %1250 = vmatpush.msra.mxu0 %v1198
        %1251 = vmatmul.f32.gmra.mxu0 %v1213
        %v1252 = vpop.f32.mrf.mxu0
        %v1253 = vadd.f32 %v1210, %v1252
        %1254 = vdwg.mxu0
        %1255 = vst [vmem:[%s363] sm:$0x7] %v1233
        %s1256 = scalar_lea.vmem %s363, 4 [#allocation4]
        %1257 = vst [vmem:[%s1256] sm:$0x7] %v1253
        %s1258 = sand.u32 %s206, 1
        %s1259 = sand.u32 %s206, 1
        %s1260 = smul.addr %s1259, 8
        %s1261 = scalar_lea.vmem [#allocation4], %s1260
        // Predicated region
        $region53: #{tpu_custom_call.1} parent=47 // pred_check
          %p1262 = pneg %p216
        $region54: #{tpu_custom_call.1} parent=47 // pred_check_branch
          %1264 = sbr.rel (%p1262) target = $region56
        $region55: #{tpu_custom_call.1} parent=47 // pred_region
          %s1265 = smul.addr %s21, 4
          %s1266 = scalar_lea.vmem %s7, %s1265
          // Predicated region
          $region57: #{tpu_custom_call.1} parent=55 // pred_check
            _
          $region58: #{tpu_custom_call.1} parent=55 // pred_check_branch
            %1268 = sbr.rel (0) target = $region60
          $region59: #{tpu_custom_call.1} parent=55 // pred_region
            // Predicated region
            $region61: #{tpu_custom_call.1} parent=59 // pred_check
              _
            $region62: #{tpu_custom_call.1} parent=59 // pred_check_branch
              %1270 = sbr.rel target = $region64
            $region63: #{tpu_custom_call.1} parent=59 // pred_region
              // Predicated region
              $region76: #{tpu_custom_call.1} parent=63 // pred_check
                _
              $region77: #{tpu_custom_call.1} parent=63 // pred_check_branch
                %1288 = sbr.rel (0) target = $region79
              $region78: #{tpu_custom_call.1} parent=63 // pred_region
                loop: start=0, step=1, limit=1
                $region80: #{tpu_custom_call.1} parent=78 // loop_pre_header
                  _
                $region81: #{tpu_custom_call.1} parent=78 // loop_header
                  %s1290 = sphi 0, %s1294
                  %p1291 = scmp.ge.s32.totalorder %s1290, 1
                  %s1295 = sphi %s1261, %s1261
                  %s1296 = sphi %s1266, %s1266
                $region82: #{tpu_custom_call.1} parent=78 // loop_header_branch
                  %1293 = sbr.rel (%p1291) target = $region86
                $region83: #{tpu_custom_call.1} parent=78 // loop_body
                  _
                $region84: #{tpu_custom_call.1} parent=78 // loop_footer
                  %s1294 = sadd.s32 1, %s1290
                $region85: #{tpu_custom_call.1} parent=78 // loop_footer_branch
                  %1289 = sbr.rel target = $region81
                $region86: #{tpu_custom_call.1} parent=78 // loop_exit
                  _
                %s1298 = ssub.s32 16, 1
                loop: start=0, step=1, limit=1
                $region87: #{tpu_custom_call.1} parent=78 // loop_pre_header
                  _
                $region88: #{tpu_custom_call.1} parent=78 // loop_header
                  %s1300 = sphi 0, %s1304
                  %p1301 = scmp.ge.s32.totalorder %s1300, 1
                  %s1305 = sphi %s1261, %s1261
                  %s1306 = sphi %s1266, %s1266
                $region89: #{tpu_custom_call.1} parent=78 // loop_header_branch
                  %1303 = sbr.rel (%p1301) target = $region93
                $region90: #{tpu_custom_call.1} parent=78 // loop_body
                  %v1307 = vld [vmem:[%s1305] sm:%s1298]
                  %1308 = vst [vmem:[%s1306] sm:%s1298] %v1307
                  %v1309 = vld [vmem:[%s1305 + $0x4] sm:%s1298]
                  %1310 = vst [vmem:[%s1306 + $0x8] sm:%s1298] %v1309
                $region91: #{tpu_custom_call.1} parent=78 // loop_footer
                  %s1304 = sadd.s32 1, %s1300
                $region92: #{tpu_custom_call.1} parent=78 // loop_footer_branch
                  %1299 = sbr.rel target = $region88
                $region93: #{tpu_custom_call.1} parent=78 // loop_exit
                  _
              $region79: #{tpu_custom_call.1} parent=63 // pred_fallthru
                _
            $region64: #{tpu_custom_call.1} parent=59 // pred_fallthru
              _
            // Predicated region
            $region65: #{tpu_custom_call.1} parent=59 // pred_check
              _
            $region66: #{tpu_custom_call.1} parent=59 // pred_check_branch
              %1272 = sbr.rel (0) target = $region68
            $region67: #{tpu_custom_call.1} parent=59 // pred_region
              %s1274 = ssub.s32 16, 1
              loop: start=0, step=1, limit=1
              $region69: #{tpu_custom_call.1} parent=67 // loop_pre_header
                _
              $region70: #{tpu_custom_call.1} parent=67 // loop_header
                %s1276 = sphi 0, %s1280
                %p1277 = scmp.ge.s32.totalorder %s1276, 1
                %s1281 = sphi %s1261, %s1261
                %s1282 = sphi %s1266, %s1266
              $region71: #{tpu_custom_call.1} parent=67 // loop_header_branch
                %1279 = sbr.rel (%p1277) target = $region75
              $region72: #{tpu_custom_call.1} parent=67 // loop_body
                %v1283 = vld [vmem:[%s1281] sm:%s1274]
                %1284 = vst [vmem:[%s1282] sm:%s1274] %v1283
                %v1285 = vld [vmem:[%s1281 + $0x4] sm:%s1274]
                %1286 = vst [vmem:[%s1282 + $0x8] sm:%s1274] %v1285
              $region73: #{tpu_custom_call.1} parent=67 // loop_footer
                %s1280 = sadd.s32 1, %s1276
              $region74: #{tpu_custom_call.1} parent=67 // loop_footer_branch
                %1275 = sbr.rel target = $region70
              $region75: #{tpu_custom_call.1} parent=67 // loop_exit
                _
            $region68: #{tpu_custom_call.1} parent=59 // pred_fallthru
              _
          $region60: #{tpu_custom_call.1} parent=55 // pred_fallthru
            _
          %1311 = vnop
        $region56: #{tpu_custom_call.1} parent=47 // pred_fallthru
          _
      $region48: #{tpu_custom_call.1} parent=5 // pred_fallthru
        _
      %p1312 = scmp.le.s32.totalorder 2, %s16
      // Predicated region
      $region94: #{tpu_custom_call.1} parent=5 // pred_check
        %p1313 = pneg %p1312
      $region95: #{tpu_custom_call.1} parent=5 // pred_check_branch
        %1315 = sbr.rel (%p1313) target = $region97
      $region96: #{tpu_custom_call.1} parent=5 // pred_region
        %s1316 = ssub.s32 %s16, 2
        // Predicated region
        $region98: #{tpu_custom_call.1} parent=96 // pred_check
          %p1317 = pneg %p222
        $region99: #{tpu_custom_call.1} parent=96 // pred_check_branch
          %1319 = sbr.rel (%p1317) target = $region101
        $region100: #{tpu_custom_call.1} parent=96 // pred_region
          %s1320 = sand.u32 %s207, 1
          %s1321 = sand.u32 %s207, 1
          %s1322 = smul.addr %s1321, 8
          %s1323 = scalar_lea.vmem [#allocation4], %s1322
        $region101: #{tpu_custom_call.1} parent=96 // pred_fallthru
          _
      $region97: #{tpu_custom_call.1} parent=5 // pred_fallthru
        _
    $region6: #{tpu_custom_call.1} parent=1 // loop_footer
      %s20 = sadd.s32 1, %s16
    $region7: #{tpu_custom_call.1} parent=1 // loop_footer_branch
      %15 = sbr.rel target = $region3
    $region8: #{tpu_custom_call.1} parent=1 // loop_exit
      _
    %1324 = vsyncpa [#allocation3], 1
    %s1325 = scalar_lea.sflag [#allocation3], 1
    %1326 = vsyncpa %s1325, 1

</llo_original>
